<compile_context>
chip_gen: v6e
topology: v6e:2x2x1
jax: 0.10.0
libtpu: 0.0.40
codegen_flags: <defaults>
</compile_context>

<pallas_src>
import functools
import math

import jax
import jax.numpy as jnp
from jax.experimental import pallas as pl
from jax.experimental.pallas import tpu as pltpu


def _round_up(x, m):
    return (x + m - 1) // m * m


# ----------------------------------------------------------------------------
# Pallas kernels
# ----------------------------------------------------------------------------
def _conv_mm_kernel(p_ref, w_ref, b_ref, o_ref):
    # w: (Cout, Kp) bf16, p: (Kp, TILE_M) bf16 -> acc (Cout, TILE_M) f32.
    # Output is lane-dense (last dim = TILE_M, multiple of 128).
    acc = jnp.dot(w_ref[...], p_ref[...], preferred_element_type=jnp.float32)
    o_ref[...] = acc + b_ref[...]


def _stft_mag_kernel(fr_ref, wb_ref, o_ref, *, fp):
    # fr: (TILE_R, nfft) f32; wb: (nfft, 2*fp) f32 = [win*scale*cos | -win*scale*sin].
    y = jnp.dot(fr_ref[...], wb_ref[...], preferred_element_type=jnp.float32)
    re = y[:, :fp]
    im = y[:, fp:]
    o_ref[...] = jnp.sqrt(jnp.maximum(re * re + im * im, 1e-7))


# ----------------------------------------------------------------------------
# Conv layer = (optional LeakyReLU) + ReflectionPad2d(1) + 3x3 weight-norm conv
# stride / leaky are STATIC Python values (not pytree leaves).
# ----------------------------------------------------------------------------
def conv2d_pallas(x_nchw, w, b, stride, leaky):
    B, Cin, H, W = x_nchw.shape
    Cout = w.shape[0]
    if leaky:
        # On the un-duplicated tensor (not the 9x-expanded patches); XLA fuses
        # this with the pad / im2col slicing below.
        x_nchw = jnp.where(x_nchw >= 0, x_nchw, 0.2 * x_nchw)
    xp = jnp.pad(x_nchw, ((0, 0), (0, 0), (1, 1), (1, 1)), mode="reflect")
    Ho = (H + 2 - 3) // stride + 1
    Wo = (W + 2 - 3) // stride + 1

    # TODO(synk): im2col is still XLA-side glue; moving patch extraction into the
    # kernel (9 shifted dots over a padded row tile) would cut HBM traffic ~9x.
    cols = []
    for ky in range(3):
        for kx in range(3):
            cols.append(xp[:, :, ky:ky + (Ho - 1) * stride + 1:stride,
                               kx:kx + (Wo - 1) * stride + 1:stride])
    patches = jnp.stack(cols, axis=2)                         # (B, Cin, 9, Ho, Wo)
    patches_t = patches.transpose(1, 2, 0, 3, 4).reshape(Cin * 9, B * Ho * Wo)

    K = Cin * 9
    Kp = _round_up(K, 16)                      # bf16 sublane-friendly
    M = B * Ho * Wo
    tile_m = min(512, _round_up(M, 128))       # small enough for v7x's 64 MiB VMEM
    Mp = _round_up(M, tile_m)

    patches_t = jnp.pad(patches_t, ((0, Kp - K), (0, Mp - M))).astype(jnp.bfloat16)
    w_t = jnp.pad(w.reshape(Cout, K), ((0, 0), (0, Kp - K))).astype(jnp.bfloat16)
    b_col = b.reshape(Cout, 1).astype(jnp.float32)

    out_t = pl.pallas_call(
        _conv_mm_kernel,
        out_shape=jax.ShapeDtypeStruct((Cout, Mp), jnp.float32),
        grid=(Mp // tile_m,),
        in_specs=[
            pl.BlockSpec((Kp, tile_m), lambda i: (0, i)),     # pipelined row tiles
            pl.BlockSpec((Cout, Kp), lambda i: (0, 0)),       # weights resident
            pl.BlockSpec((Cout, 1), lambda i: (0, 0)),        # bias resident
        ],
        out_specs=pl.BlockSpec((Cout, tile_m), lambda i: (0, i)),
        compiler_params=pltpu.CompilerParams(dimension_semantics=("parallel",)),
    )(patches_t, w_t, b_col)

    return out_t[:, :M].reshape(Cout, B, Ho, Wo).transpose(1, 0, 2, 3)  # NCHW


# ----------------------------------------------------------------------------
# STFT magnitude (TorchSTFT(fft=4*hop, hop, win=4*hop, normalized=True))
# ----------------------------------------------------------------------------
def stft_magnitude(x, hop):
    # x: (B, T) waveform; periodic Hann; center reflect-pad like torch.stft.
    B, T = x.shape
    nfft = 4 * hop
    freq = nfft // 2 + 1
    pad = nfft // 2
    xp = jnp.pad(x, ((0, 0), (pad, pad)), mode="reflect")
    n_frames = 1 + T // hop
    # TODO(synk): frame gather is still XLA-side (4x-expanded copy); in-kernel
    # framing over the padded waveform (pl.ds / manual DMA) would remove it.
    idx = jnp.arange(n_frames)[:, None] * hop + jnp.arange(nfft)[None, :]
    frames = xp[:, idx].reshape(B * n_frames, nfft).astype(jnp.float32)

    n = jnp.arange(nfft, dtype=jnp.float32)
    f = jnp.arange(freq, dtype=jnp.float32)
    ang = 2.0 * math.pi * n[:, None] * f[None, :] / nfft
    window = 0.5 - 0.5 * jnp.cos(2.0 * math.pi * n / nfft)      # periodic Hann
    scale = 1.0 / math.sqrt(nfft)                               # normalized=True
    wcol = (window * scale)[:, None]
    fp = _round_up(freq, 128)                   # lane-dense output / basis columns
    basis = jnp.zeros((nfft, 2 * fp), jnp.float32)
    basis = basis.at[:, :freq].set(wcol * jnp.cos(ang))
    basis = basis.at[:, fp:fp + freq].set(wcol * (-jnp.sin(ang)))

    R = B * n_frames
    tile_r = min(256, _round_up(R, 8))
    Rp = _round_up(R, tile_r)
    frames = jnp.pad(frames, ((0, Rp - R), (0, 0)))

    mag = pl.pallas_call(
        functools.partial(_stft_mag_kernel, fp=fp),
        out_shape=jax.ShapeDtypeStruct((Rp, fp), jnp.float32),
        grid=(Rp // tile_r,),
        in_specs=[
            pl.BlockSpec((tile_r, nfft), lambda i: (i, 0)),     # pipelined frames
            pl.BlockSpec((nfft, 2 * fp), lambda i: (0, 0)),     # basis resident
        ],
        out_specs=pl.BlockSpec((tile_r, fp), lambda i: (i, 0)),
        compiler_params=pltpu.CompilerParams(dimension_semantics=("parallel",)),
    )(frames, basis)
    return mag[:R, :freq].reshape(B, n_frames, freq)   # == torch stft(...).transpose(2,1)


# ----------------------------------------------------------------------------
# Parameters (arrays only — strides / leaky flags are static constants)
# ----------------------------------------------------------------------------
_STRIDES = (1, 2, 1, 2, 1, 2, 1)   # per FrequenceDiscriminator layer


def init_freq_discriminator(key, in_channels, hidden):
    chans = [in_channels, hidden // 32, hidden // 16, hidden // 8,
             hidden // 4, hidden // 2, hidden, 1]
    params = []
    for i in range(7):
        key, kw, kb = jax.random.split(key, 3)
        cin, cout = chans[i], chans[i + 1]
        v = jax.random.normal(kw, (cout, cin, 3, 3), jnp.float32) * 0.1
        # weight_norm reparameterization: w = g * v / ||v||; PyTorch init sets
        # g = ||v|| so w == v at init — kept explicit for fidelity.
        norm = jnp.sqrt(jnp.sum(v * v, axis=(1, 2, 3), keepdims=True))
        w = norm * v / norm
        b = jax.random.normal(kb, (cout,), jnp.float32) * 0.1
        params.append({"w": w, "b": b})
    return params


def freq_discriminator_forward(x, params):
    hiddens = []
    for i, p in enumerate(params):
        x = conv2d_pallas(x, p["w"], p["b"], stride=_STRIDES[i], leaky=(i > 0))
        hiddens.append(x)
    return x, hiddens[:-1]


def multi_frequency_discriminator(y, y_hat, all_params, hop_lengths):
    if y.ndim == 3:
        y = y.reshape(-1, y.shape[-1])
    if y_hat.ndim == 3:
        y_hat = y_hat.reshape(-1, y_hat.shape[-1])
    b_real = y.shape[0]
    # Shared weights per layer: batch real+fake together, run the stack once per
    # hop, split results afterwards (halves launches, doubles rows per tile).
    y_all = jnp.concatenate([y, y_hat], axis=0)
    real_outputs, fake_outputs = [], []
    real_fmaps, fake_fmaps = [], []
    # TODO(synk): domain='double' path (chunk/stack of 2-channel mag) not implemented;
    # this reproduces the domain='linear' branch (in_channels=1, mag.unsqueeze(1)).
    for hop, params in zip(hop_lengths, all_params):
        mag = stft_magnitude(y_all, hop)[:, None]       # (2B, 1, frames, freq) NCHW
        out, fmaps = freq_discriminator_forward(mag, params)
        real_outputs.append(out[:b_real])
        fake_outputs.append(out[b_real:])
        real_fmaps.append([h[:b_real] for h in fmaps])
        fake_fmaps.append([h[b_real:] for h in fmaps])
    return real_outputs, fake_outputs, real_fmaps, fake_fmaps


if __name__ == "__main__":
    key = jax.random.PRNGKey(0)
    k_y, k_yh, k_p = jax.random.split(key, 3)

    B, T = 2, 128
    hop_lengths = [8, 16]
    hidden_channels = [32, 32]

    y = jax.random.normal(k_y, (B, 1, T), jnp.float32)
    y_hat = jax.random.normal(k_yh, (B, 1, T), jnp.float32)

    all_params = [
        init_freq_discriminator(jax.random.fold_in(k_p, i), 1, hc)
        for i, hc in enumerate(hidden_channels)
    ]

    fwd = jax.jit(lambda a, b, p: multi_frequency_discriminator(a, b, p, hop_lengths))
    outs = fwd(y, y_hat, all_params)
    jax.block_until_ready(outs)
    print("KERNEL_OK")
</pallas_src>

<mosaic_0001>
module attributes {stable_mosaic.version = 11 : i64} {
  func.func @_stft_mag_kernel(%arg0: i32, %arg1: memref<72x32xf32, #tpu.memory_space<vmem>>, %arg2: memref<32x256xf32, #tpu.memory_space<vmem>>, %arg3: memref<72x128xf32, #tpu.memory_space<vmem>>) attributes {dimension_semantics = [#tpu.dimension_semantics<parallel>], iteration_bounds = array<i64: 1>, scalar_prefetch = 0 : i64, scratch_operands = 0 : i64, tpu.core_type = #tpu.core_type<tc>, window_params = [{transform_indices = @transform_0, window_bounds = array<i64: 72, 32>}, {pipeline_mode = #tpu.pipeline_mode<synchronous>, transform_indices = @transform_1, window_bounds = array<i64: 32, 256>}, {transform_indices = @transform_2, window_bounds = array<i64: 72, 128>}]} {
    %c0 = arith.constant 0 : index
    %c0_0 = arith.constant 0 : index
    %0 = vector.load %arg1[%c0, %c0_0] : memref<72x32xf32, #tpu.memory_space<vmem>>, vector<72x32xf32>
    %c0_1 = arith.constant 0 : index
    %c0_2 = arith.constant 0 : index
    %1 = vector.load %arg2[%c0_1, %c0_2] : memref<32x256xf32, #tpu.memory_space<vmem>>, vector<32x256xf32>
    %cst = arith.constant dense<0.000000e+00> : vector<72x256xf32>
    %2 = tpu.matmul %0, %1, %cst {dimension_numbers = #tpu.dot_dimension_numbers<[1], [0], [0], [1], [0, 0, 1, 1], [], []>} : vector<72x32xf32>, vector<32x256xf32>, vector<72x256xf32> -> vector<72x256xf32>
    %3 = vector.extract_strided_slice %2 {offsets = [0, 0], sizes = [72, 128], strides = [1, 1]} : vector<72x256xf32> to vector<72x128xf32>
    %4 = vector.extract_strided_slice %2 {offsets = [0, 128], sizes = [72, 128], strides = [1, 1]} : vector<72x256xf32> to vector<72x128xf32>
    %5 = arith.mulf %3, %3 : vector<72x128xf32>
    %6 = arith.mulf %4, %4 : vector<72x128xf32>
    %7 = arith.addf %5, %6 : vector<72x128xf32>
    %cst_3 = arith.constant 1.000000e-07 : f32
    %8 = vector.broadcast %cst_3 : f32 to vector<72x128xf32>
    %9 = arith.maximumf %7, %8 : vector<72x128xf32>
    %10 = math.sqrt %9 : vector<72x128xf32>
    %c0_4 = arith.constant 0 : index
    %c0_5 = arith.constant 0 : index
    %11 = vector.load %arg3[%c0_4, %c0_5] : memref<72x128xf32, #tpu.memory_space<vmem>>, vector<72x128xf32>
    tpu.vector_store %arg3[%c0_4, %c0_5], %10 {strides = array<i32>} : memref<72x128xf32, #tpu.memory_space<vmem>>, vector<72x128xf32>,
    return
  }
  func.func @transform_0(%arg0: i32) -> (i32, i32) {
    %c0_i32 = arith.constant 0 : i32
    %c0_i32_0 = arith.constant 0 : i32
    return %arg0, %c0_i32 : i32, i32
  }
  func.func @transform_1(%arg0: i32) -> (i32, i32) {
    %c0_i32 = arith.constant 0 : i32
    %c0_i32_0 = arith.constant 0 : i32
    %c0_i32_1 = arith.constant 0 : i32
    return %c0_i32, %c0_i32_0 : i32, i32
  }
  func.func @transform_2(%arg0: i32) -> (i32, i32) {
    %c0_i32 = arith.constant 0 : i32
    %c0_i32_0 = arith.constant 0 : i32
    return %arg0, %c0_i32 : i32, i32
  }
}

module attributes {stable_mosaic.version = 11 : i64} {
  func.func @_conv_mm_kernel(%arg0: i32, %arg1: memref<16x512xbf16, #tpu.memory_space<vmem>>, %arg2: memref<1x16xbf16, #tpu.memory_space<vmem>>, %arg3: memref<1x1xf32, #tpu.memory_space<vmem>>, %arg4: memref<1x512xf32, #tpu.memory_space<vmem>>) attributes {dimension_semantics = [#tpu.dimension_semantics<parallel>], iteration_bounds = array<i64: 3>, scalar_prefetch = 0 : i64, scratch_operands = 0 : i64, tpu.core_type = #tpu.core_type<tc>, window_params = [{transform_indices = @transform_0, window_bounds = array<i64: 16, 512>}, {pipeline_mode = #tpu.pipeline_mode<synchronous>, transform_indices = @transform_1, window_bounds = array<i64: 1, 16>}, {pipeline_mode = #tpu.pipeline_mode<synchronous>, transform_indices = @transform_2, window_bounds = array<i64: 1, 1>}, {transform_indices = @transform_3, window_bounds = array<i64: 1, 512>}]} {
    %c0 = arith.constant 0 : index
    %c0_0 = arith.constant 0 : index
    %0 = vector.load %arg2[%c0, %c0_0] : memref<1x16xbf16, #tpu.memory_space<vmem>>, vector<1x16xbf16>
    %c0_1 = arith.constant 0 : index
    %c0_2 = arith.constant 0 : index
    %1 = vector.load %arg1[%c0_1, %c0_2] : memref<16x512xbf16, #tpu.memory_space<vmem>>, vector<16x512xbf16>
    %cst = arith.constant dense<0.000000e+00> : vector<1x512xf32>
    %2 = tpu.matmul %0, %1, %cst {dimension_numbers = #tpu.dot_dimension_numbers<[1], [0], [0], [1], [0, 0, 1, 1], [], []>} : vector<1x16xbf16>, vector<16x512xbf16>, vector<1x512xf32> -> vector<1x512xf32>
    %c0_3 = arith.constant 0 : index
    %c0_4 = arith.constant 0 : index
    %3 = vector.load %arg3[%c0_3, %c0_4] : memref<1x1xf32, #tpu.memory_space<vmem>>, vector<1x1xf32>
    %4 = vector.broadcast %3 : vector<1x1xf32> to vector<1x512xf32>
    %5 = arith.addf %2, %4 : vector<1x512xf32>
    %c0_5 = arith.constant 0 : index
    %c0_6 = arith.constant 0 : index
    %6 = vector.load %arg4[%c0_5, %c0_6] : memref<1x512xf32, #tpu.memory_space<vmem>>, vector<1x512xf32>
    tpu.vector_store %arg4[%c0_5, %c0_6], %5 {strides = array<i32>} : memref<1x512xf32, #tpu.memory_space<vmem>>, vector<1x512xf32>,
    return
  }
  func.func @transform_0(%arg0: i32) -> (i32, i32) {
    %c0_i32 = arith.constant 0 : i32
    %c0_i32_0 = arith.constant 0 : i32
    return %c0_i32, %arg0 : i32, i32
  }
  func.func @transform_1(%arg0: i32) -> (i32, i32) {
    %c0_i32 = arith.constant 0 : i32
    %c0_i32_0 = arith.constant 0 : i32
    %c0_i32_1 = arith.constant 0 : i32
    return %c0_i32, %c0_i32_0 : i32, i32
  }
  func.func @transform_2(%arg0: i32) -> (i32, i32) {
    %c0_i32 = arith.constant 0 : i32
    %c0_i32_0 = arith.constant 0 : i32
    %c0_i32_1 = arith.constant 0 : i32
    return %c0_i32, %c0_i32_0 : i32, i32
  }
  func.func @transform_3(%arg0: i32) -> (i32, i32) {
    %c0_i32 = arith.constant 0 : i32
    %c0_i32_0 = arith.constant 0 : i32
    return %c0_i32, %arg0 : i32, i32
  }
}

module attributes {stable_mosaic.version = 11 : i64} {
  func.func @_conv_mm_kernel(%arg0: i32, %arg1: memref<16x384xbf16, #tpu.memory_space<vmem>>, %arg2: memref<2x16xbf16, #tpu.memory_space<vmem>>, %arg3: memref<2x1xf32, #tpu.memory_space<vmem>>, %arg4: memref<2x384xf32, #tpu.memory_space<vmem>>) attributes {dimension_semantics = [#tpu.dimension_semantics<parallel>], iteration_bounds = array<i64: 1>, scalar_prefetch = 0 : i64, scratch_operands = 0 : i64, tpu.core_type = #tpu.core_type<tc>, window_params = [{transform_indices = @transform_0, window_bounds = array<i64: 16, 384>}, {pipeline_mode = #tpu.pipeline_mode<synchronous>, transform_indices = @transform_1, window_bounds = array<i64: 2, 16>}, {pipeline_mode = #tpu.pipeline_mode<synchronous>, transform_indices = @transform_2, window_bounds = array<i64: 2, 1>}, {transform_indices = @transform_3, window_bounds = array<i64: 2, 384>}]} {
    %c0 = arith.constant 0 : index
    %c0_0 = arith.constant 0 : index
    %0 = vector.load %arg2[%c0, %c0_0] : memref<2x16xbf16, #tpu.memory_space<vmem>>, vector<2x16xbf16>
    %c0_1 = arith.constant 0 : index
    %c0_2 = arith.constant 0 : index
    %1 = vector.load %arg1[%c0_1, %c0_2] : memref<16x384xbf16, #tpu.memory_space<vmem>>, vector<16x384xbf16>
    %cst = arith.constant dense<0.000000e+00> : vector<2x384xf32>
    %2 = tpu.matmul %0, %1, %cst {dimension_numbers = #tpu.dot_dimension_numbers<[1], [0], [0], [1], [0, 0, 1, 1], [], []>} : vector<2x16xbf16>, vector<16x384xbf16>, vector<2x384xf32> -> vector<2x384xf32>
    %c0_3 = arith.constant 0 : index
    %c0_4 = arith.constant 0 : index
    %3 = vector.load %arg3[%c0_3, %c0_4] : memref<2x1xf32, #tpu.memory_space<vmem>>, vector<2x1xf32>
    %4 = vector.broadcast %3 : vector<2x1xf32> to vector<2x384xf32>
    %5 = arith.addf %2, %4 : vector<2x384xf32>
    %c0_5 = arith.constant 0 : index
    %c0_6 = arith.constant 0 : index
    %6 = vector.load %arg4[%c0_5, %c0_6] : memref<2x384xf32, #tpu.memory_space<vmem>>, vector<2x384xf32>
    tpu.vector_store %arg4[%c0_5, %c0_6], %5 {strides = array<i32>} : memref<2x384xf32, #tpu.memory_space<vmem>>, vector<2x384xf32>,
    return
  }
  func.func @transform_0(%arg0: i32) -> (i32, i32) {
    %c0_i32 = arith.constant 0 : i32
    %c0_i32_0 = arith.constant 0 : i32
    return %c0_i32, %arg0 : i32, i32
  }
  func.func @transform_1(%arg0: i32) -> (i32, i32) {
    %c0_i32 = arith.constant 0 : i32
    %c0_i32_0 = arith.constant 0 : i32
    %c0_i32_1 = arith.constant 0 : i32
    return %c0_i32, %c0_i32_0 : i32, i32
  }
  func.func @transform_2(%arg0: i32) -> (i32, i32) {
    %c0_i32 = arith.constant 0 : i32
    %c0_i32_0 = arith.constant 0 : i32
    %c0_i32_1 = arith.constant 0 : i32
    return %c0_i32, %c0_i32_0 : i32, i32
  }
  func.func @transform_3(%arg0: i32) -> (i32, i32) {
    %c0_i32 = arith.constant 0 : i32
    %c0_i32_0 = arith.constant 0 : i32
    return %c0_i32, %arg0 : i32, i32
  }
}

module attributes {stable_mosaic.version = 11 : i64} {
  func.func @_conv_mm_kernel(%arg0: i32, %arg1: memref<32x384xbf16, #tpu.memory_space<vmem>>, %arg2: memref<4x32xbf16, #tpu.memory_space<vmem>>, %arg3: memref<4x1xf32, #tpu.memory_space<vmem>>, %arg4: memref<4x384xf32, #tpu.memory_space<vmem>>) attributes {dimension_semantics = [#tpu.dimension_semantics<parallel>], iteration_bounds = array<i64: 1>, scalar_prefetch = 0 : i64, scratch_operands = 0 : i64, tpu.core_type = #tpu.core_type<tc>, window_params = [{transform_indices = @transform_0, window_bounds = array<i64: 32, 384>}, {pipeline_mode = #tpu.pipeline_mode<synchronous>, transform_indices = @transform_1, window_bounds = array<i64: 4, 32>}, {pipeline_mode = #tpu.pipeline_mode<synchronous>, transform_indices = @transform_2, window_bounds = array<i64: 4, 1>}, {transform_indices = @transform_3, window_bounds = array<i64: 4, 384>}]} {
    %c0 = arith.constant 0 : index
    %c0_0 = arith.constant 0 : index
    %0 = vector.load %arg2[%c0, %c0_0] : memref<4x32xbf16, #tpu.memory_space<vmem>>, vector<4x32xbf16>
    %c0_1 = arith.constant 0 : index
    %c0_2 = arith.constant 0 : index
    %1 = vector.load %arg1[%c0_1, %c0_2] : memref<32x384xbf16, #tpu.memory_space<vmem>>, vector<32x384xbf16>
    %cst = arith.constant dense<0.000000e+00> : vector<4x384xf32>
    %2 = tpu.matmul %0, %1, %cst {dimension_numbers = #tpu.dot_dimension_numbers<[1], [0], [0], [1], [0, 0, 1, 1], [], []>} : vector<4x32xbf16>, vector<32x384xbf16>, vector<4x384xf32> -> vector<4x384xf32>
    %c0_3 = arith.constant 0 : index
    %c0_4 = arith.constant 0 : index
    %3 = vector.load %arg3[%c0_3, %c0_4] : memref<4x1xf32, #tpu.memory_space<vmem>>, vector<4x1xf32>
    %4 = vector.broadcast %3 : vector<4x1xf32> to vector<4x384xf32>
    %5 = arith.addf %2, %4 : vector<4x384xf32>
    %c0_5 = arith.constant 0 : index
    %c0_6 = arith.constant 0 : index
    %6 = vector.load %arg4[%c0_5, %c0_6] : memref<4x384xf32, #tpu.memory_space<vmem>>, vector<4x384xf32>
    tpu.vector_store %arg4[%c0_5, %c0_6], %5 {strides = array<i32>} : memref<4x384xf32, #tpu.memory_space<vmem>>, vector<4x384xf32>,
    return
  }
  func.func @transform_0(%arg0: i32) -> (i32, i32) {
    %c0_i32 = arith.constant 0 : i32
    %c0_i32_0 = arith.constant 0 : i32
    return %c0_i32, %arg0 : i32, i32
  }
  func.func @transform_1(%arg0: i32) -> (i32, i32) {
    %c0_i32 = arith.constant 0 : i32
    %c0_i32_0 = arith.constant 0 : i32
    %c0_i32_1 = arith.constant 0 : i32
    return %c0_i32, %c0_i32_0 : i32, i32
  }
  func.func @transform_2(%arg0: i32) -> (i32, i32) {
    %c0_i32 = arith.constant 0 : i32
    %c0_i32_0 = arith.constant 0 : i32
    %c0_i32_1 = arith.constant 0 : i32
    return %c0_i32, %c0_i32_0 : i32, i32
  }
  func.func @transform_3(%arg0: i32) -> (i32, i32) {
    %c0_i32 = arith.constant 0 : i32
    %c0_i32_0 = arith.constant 0 : i32
    return %c0_i32, %arg0 : i32, i32
  }
}

module attributes {stable_mosaic.version = 11 : i64} {
  func.func @_conv_mm_kernel(%arg0: i32, %arg1: memref<48x128xbf16, #tpu.memory_space<vmem>>, %arg2: memref<8x48xbf16, #tpu.memory_space<vmem>>, %arg3: memref<8x1xf32, #tpu.memory_space<vmem>>, %arg4: memref<8x128xf32, #tpu.memory_space<vmem>>) attributes {dimension_semantics = [#tpu.dimension_semantics<parallel>], iteration_bounds = array<i64: 1>, scalar_prefetch = 0 : i64, scratch_operands = 0 : i64, tpu.core_type = #tpu.core_type<tc>, window_params = [{transform_indices = @transform_0, window_bounds = array<i64: 48, 128>}, {pipeline_mode = #tpu.pipeline_mode<synchronous>, transform_indices = @transform_1, window_bounds = array<i64: 8, 48>}, {pipeline_mode = #tpu.pipeline_mode<synchronous>, transform_indices = @transform_2, window_bounds = array<i64: 8, 1>}, {transform_indices = @transform_3, window_bounds = array<i64: 8, 128>}]} {
    %c0 = arith.constant 0 : index
    %c0_0 = arith.constant 0 : index
    %0 = vector.load %arg2[%c0, %c0_0] : memref<8x48xbf16, #tpu.memory_space<vmem>>, vector<8x48xbf16>
    %c0_1 = arith.constant 0 : index
    %c0_2 = arith.constant 0 : index
    %1 = vector.load %arg1[%c0_1, %c0_2] : memref<48x128xbf16, #tpu.memory_space<vmem>>, vector<48x128xbf16>
    %cst = arith.constant dense<0.000000e+00> : vector<8x128xf32>
    %2 = tpu.matmul %0, %1, %cst {dimension_numbers = #tpu.dot_dimension_numbers<[1], [0], [0], [1], [0, 0, 1, 1], [], []>} : vector<8x48xbf16>, vector<48x128xbf16>, vector<8x128xf32> -> vector<8x128xf32>
    %c0_3 = arith.constant 0 : index
    %c0_4 = arith.constant 0 : index
    %3 = vector.load %arg3[%c0_3, %c0_4] : memref<8x1xf32, #tpu.memory_space<vmem>>, vector<8x1xf32>
    %4 = vector.broadcast %3 : vector<8x1xf32> to vector<8x128xf32>
    %5 = arith.addf %2, %4 : vector<8x128xf32>
    %c0_5 = arith.constant 0 : index
    %c0_6 = arith.constant 0 : index
    %6 = vector.load %arg4[%c0_5, %c0_6] : memref<8x128xf32, #tpu.memory_space<vmem>>, vector<8x128xf32>
    tpu.vector_store %arg4[%c0_5, %c0_6], %5 {strides = array<i32>} : memref<8x128xf32, #tpu.memory_space<vmem>>, vector<8x128xf32>,
    return
  }
  func.func @transform_0(%arg0: i32) -> (i32, i32) {
    %c0_i32 = arith.constant 0 : i32
    %c0_i32_0 = arith.constant 0 : i32
    return %c0_i32, %arg0 : i32, i32
  }
  func.func @transform_1(%arg0: i32) -> (i32, i32) {
    %c0_i32 = arith.constant 0 : i32
    %c0_i32_0 = arith.constant 0 : i32
    %c0_i32_1 = arith.constant 0 : i32
    return %c0_i32, %c0_i32_0 : i32, i32
  }
  func.func @transform_2(%arg0: i32) -> (i32, i32) {
    %c0_i32 = arith.constant 0 : i32
    %c0_i32_0 = arith.constant 0 : i32
    %c0_i32_1 = arith.constant 0 : i32
    return %c0_i32, %c0_i32_0 : i32, i32
  }
  func.func @transform_3(%arg0: i32) -> (i32, i32) {
    %c0_i32 = arith.constant 0 : i32
    %c0_i32_0 = arith.constant 0 : i32
    return %c0_i32, %arg0 : i32, i32
  }
}

module attributes {stable_mosaic.version = 11 : i64} {
  func.func @_conv_mm_kernel(%arg0: i32, %arg1: memref<80x128xbf16, #tpu.memory_space<vmem>>, %arg2: memref<16x80xbf16, #tpu.memory_space<vmem>>, %arg3: memref<16x1xf32, #tpu.memory_space<vmem>>, %arg4: memref<16x128xf32, #tpu.memory_space<vmem>>) attributes {dimension_semantics = [#tpu.dimension_semantics<parallel>], iteration_bounds = array<i64: 1>, scalar_prefetch = 0 : i64, scratch_operands = 0 : i64, tpu.core_type = #tpu.core_type<tc>, window_params = [{transform_indices = @transform_0, window_bounds = array<i64: 80, 128>}, {pipeline_mode = #tpu.pipeline_mode<synchronous>, transform_indices = @transform_1, window_bounds = array<i64: 16, 80>}, {pipeline_mode = #tpu.pipeline_mode<synchronous>, transform_indices = @transform_2, window_bounds = array<i64: 16, 1>}, {transform_indices = @transform_3, window_bounds = array<i64: 16, 128>}]} {
    %c0 = arith.constant 0 : index
    %c0_0 = arith.constant 0 : index
    %0 = vector.load %arg2[%c0, %c0_0] : memref<16x80xbf16, #tpu.memory_space<vmem>>, vector<16x80xbf16>
    %c0_1 = arith.constant 0 : index
    %c0_2 = arith.constant 0 : index
    %1 = vector.load %arg1[%c0_1, %c0_2] : memref<80x128xbf16, #tpu.memory_space<vmem>>, vector<80x128xbf16>
    %cst = arith.constant dense<0.000000e+00> : vector<16x128xf32>
    %2 = tpu.matmul %0, %1, %cst {dimension_numbers = #tpu.dot_dimension_numbers<[1], [0], [0], [1], [0, 0, 1, 1], [], []>} : vector<16x80xbf16>, vector<80x128xbf16>, vector<16x128xf32> -> vector<16x128xf32>
    %c0_3 = arith.constant 0 : index
    %c0_4 = arith.constant 0 : index
    %3 = vector.load %arg3[%c0_3, %c0_4] : memref<16x1xf32, #tpu.memory_space<vmem>>, vector<16x1xf32>
    %4 = vector.broadcast %3 : vector<16x1xf32> to vector<16x128xf32>
    %5 = arith.addf %2, %4 : vector<16x128xf32>
    %c0_5 = arith.constant 0 : index
    %c0_6 = arith.constant 0 : index
    %6 = vector.load %arg4[%c0_5, %c0_6] : memref<16x128xf32, #tpu.memory_space<vmem>>, vector<16x128xf32>
    tpu.vector_store %arg4[%c0_5, %c0_6], %5 {strides = array<i32>} : memref<16x128xf32, #tpu.memory_space<vmem>>, vector<16x128xf32>,
    return
  }
  func.func @transform_0(%arg0: i32) -> (i32, i32) {
    %c0_i32 = arith.constant 0 : i32
    %c0_i32_0 = arith.constant 0 : i32
    return %c0_i32, %arg0 : i32, i32
  }
  func.func @transform_1(%arg0: i32) -> (i32, i32) {
    %c0_i32 = arith.constant 0 : i32
    %c0_i32_0 = arith.constant 0 : i32
    %c0_i32_1 = arith.constant 0 : i32
    return %c0_i32, %c0_i32_0 : i32, i32
  }
  func.func @transform_2(%arg0: i32) -> (i32, i32) {
    %c0_i32 = arith.constant 0 : i32
    %c0_i32_0 = arith.constant 0 : i32
    %c0_i32_1 = arith.constant 0 : i32
    return %c0_i32, %c0_i32_0 : i32, i32
  }
  func.func @transform_3(%arg0: i32) -> (i32, i32) {
    %c0_i32 = arith.constant 0 : i32
    %c0_i32_0 = arith.constant 0 : i32
    return %c0_i32, %arg0 : i32, i32
  }
}

module attributes {stable_mosaic.version = 11 : i64} {
  func.func @_conv_mm_kernel(%arg0: i32, %arg1: memref<144x128xbf16, #tpu.memory_space<vmem>>, %arg2: memref<32x144xbf16, #tpu.memory_space<vmem>>, %arg3: memref<32x1xf32, #tpu.memory_space<vmem>>, %arg4: memref<32x128xf32, #tpu.memory_space<vmem>>) attributes {dimension_semantics = [#tpu.dimension_semantics<parallel>], iteration_bounds = array<i64: 1>, scalar_prefetch = 0 : i64, scratch_operands = 0 : i64, tpu.core_type = #tpu.core_type<tc>, window_params = [{transform_indices = @transform_0, window_bounds = array<i64: 144, 128>}, {pipeline_mode = #tpu.pipeline_mode<synchronous>, transform_indices = @transform_1, window_bounds = array<i64: 32, 144>}, {pipeline_mode = #tpu.pipeline_mode<synchronous>, transform_indices = @transform_2, window_bounds = array<i64: 32, 1>}, {transform_indices = @transform_3, window_bounds = array<i64: 32, 128>}]} {
    %c0 = arith.constant 0 : index
    %c0_0 = arith.constant 0 : index
    %0 = vector.load %arg2[%c0, %c0_0] : memref<32x144xbf16, #tpu.memory_space<vmem>>, vector<32x144xbf16>
    %c0_1 = arith.constant 0 : index
    %c0_2 = arith.constant 0 : index
    %1 = vector.load %arg1[%c0_1, %c0_2] : memref<144x128xbf16, #tpu.memory_space<vmem>>, vector<144x128xbf16>
    %cst = arith.constant dense<0.000000e+00> : vector<32x128xf32>
    %2 = tpu.matmul %0, %1, %cst {dimension_numbers = #tpu.dot_dimension_numbers<[1], [0], [0], [1], [0, 0, 1, 1], [], []>} : vector<32x144xbf16>, vector<144x128xbf16>, vector<32x128xf32> -> vector<32x128xf32>
    %c0_3 = arith.constant 0 : index
    %c0_4 = arith.constant 0 : index
    %3 = vector.load %arg3[%c0_3, %c0_4] : memref<32x1xf32, #tpu.memory_space<vmem>>, vector<32x1xf32>
    %4 = vector.broadcast %3 : vector<32x1xf32> to vector<32x128xf32>
    %5 = arith.addf %2, %4 : vector<32x128xf32>
    %c0_5 = arith.constant 0 : index
    %c0_6 = arith.constant 0 : index
    %6 = vector.load %arg4[%c0_5, %c0_6] : memref<32x128xf32, #tpu.memory_space<vmem>>, vector<32x128xf32>
    tpu.vector_store %arg4[%c0_5, %c0_6], %5 {strides = array<i32>} : memref<32x128xf32, #tpu.memory_space<vmem>>, vector<32x128xf32>,
    return
  }
  func.func @transform_0(%arg0: i32) -> (i32, i32) {
    %c0_i32 = arith.constant 0 : i32
    %c0_i32_0 = arith.constant 0 : i32
    return %c0_i32, %arg0 : i32, i32
  }
  func.func @transform_1(%arg0: i32) -> (i32, i32) {
    %c0_i32 = arith.constant 0 : i32
    %c0_i32_0 = arith.constant 0 : i32
    %c0_i32_1 = arith.constant 0 : i32
    return %c0_i32, %c0_i32_0 : i32, i32
  }
  func.func @transform_2(%arg0: i32) -> (i32, i32) {
    %c0_i32 = arith.constant 0 : i32
    %c0_i32_0 = arith.constant 0 : i32
    %c0_i32_1 = arith.constant 0 : i32
    return %c0_i32, %c0_i32_0 : i32, i32
  }
  func.func @transform_3(%arg0: i32) -> (i32, i32) {
    %c0_i32 = arith.constant 0 : i32
    %c0_i32_0 = arith.constant 0 : i32
    return %c0_i32, %arg0 : i32, i32
  }
}

module attributes {stable_mosaic.version = 11 : i64} {
  func.func @_conv_mm_kernel(%arg0: i32, %arg1: memref<288x128xbf16, #tpu.memory_space<vmem>>, %arg2: memref<1x288xbf16, #tpu.memory_space<vmem>>, %arg3: memref<1x1xf32, #tpu.memory_space<vmem>>, %arg4: memref<1x128xf32, #tpu.memory_space<vmem>>) attributes {dimension_semantics = [#tpu.dimension_semantics<parallel>], iteration_bounds = array<i64: 1>, scalar_prefetch = 0 : i64, scratch_operands = 0 : i64, tpu.core_type = #tpu.core_type<tc>, window_params = [{transform_indices = @transform_0, window_bounds = array<i64: 288, 128>}, {pipeline_mode = #tpu.pipeline_mode<synchronous>, transform_indices = @transform_1, window_bounds = array<i64: 1, 288>}, {pipeline_mode = #tpu.pipeline_mode<synchronous>, transform_indices = @transform_2, window_bounds = array<i64: 1, 1>}, {transform_indices = @transform_3, window_bounds = array<i64: 1, 128>}]} {
    %c0 = arith.constant 0 : index
    %c0_0 = arith.constant 0 : index
    %0 = vector.load %arg2[%c0, %c0_0] : memref<1x288xbf16, #tpu.memory_space<vmem>>, vector<1x288xbf16>
    %c0_1 = arith.constant 0 : index
    %c0_2 = arith.constant 0 : index
    %1 = vector.load %arg1[%c0_1, %c0_2] : memref<288x128xbf16, #tpu.memory_space<vmem>>, vector<288x128xbf16>
    %cst = arith.constant dense<0.000000e+00> : vector<1x128xf32>
    %2 = tpu.matmul %0, %1, %cst {dimension_numbers = #tpu.dot_dimension_numbers<[1], [0], [0], [1], [0, 0, 1, 1], [], []>} : vector<1x288xbf16>, vector<288x128xbf16>, vector<1x128xf32> -> vector<1x128xf32>
    %c0_3 = arith.constant 0 : index
    %c0_4 = arith.constant 0 : index
    %3 = vector.load %arg3[%c0_3, %c0_4] : memref<1x1xf32, #tpu.memory_space<vmem>>, vector<1x1xf32>
    %4 = vector.broadcast %3 : vector<1x1xf32> to vector<1x128xf32>
    %5 = arith.addf %2, %4 : vector<1x128xf32>
    %c0_5 = arith.constant 0 : index
    %c0_6 = arith.constant 0 : index
    %6 = vector.load %arg4[%c0_5, %c0_6] : memref<1x128xf32, #tpu.memory_space<vmem>>, vector<1x128xf32>
    tpu.vector_store %arg4[%c0_5, %c0_6], %5 {strides = array<i32>} : memref<1x128xf32, #tpu.memory_space<vmem>>, vector<1x128xf32>,
    return
  }
  func.func @transform_0(%arg0: i32) -> (i32, i32) {
    %c0_i32 = arith.constant 0 : i32
    %c0_i32_0 = arith.constant 0 : i32
    return %c0_i32, %arg0 : i32, i32
  }
  func.func @transform_1(%arg0: i32) -> (i32, i32) {
    %c0_i32 = arith.constant 0 : i32
    %c0_i32_0 = arith.constant 0 : i32
    %c0_i32_1 = arith.constant 0 : i32
    return %c0_i32, %c0_i32_0 : i32, i32
  }
  func.func @transform_2(%arg0: i32) -> (i32, i32) {
    %c0_i32 = arith.constant 0 : i32
    %c0_i32_0 = arith.constant 0 : i32
    %c0_i32_1 = arith.constant 0 : i32
    return %c0_i32, %c0_i32_0 : i32, i32
  }
  func.func @transform_3(%arg0: i32) -> (i32, i32) {
    %c0_i32 = arith.constant 0 : i32
    %c0_i32_0 = arith.constant 0 : i32
    return %c0_i32, %arg0 : i32, i32
  }
}

module attributes {stable_mosaic.version = 11 : i64} {
  func.func @_stft_mag_kernel(%arg0: i32, %arg1: memref<40x64xf32, #tpu.memory_space<vmem>>, %arg2: memref<64x256xf32, #tpu.memory_space<vmem>>, %arg3: memref<40x128xf32, #tpu.memory_space<vmem>>) attributes {dimension_semantics = [#tpu.dimension_semantics<parallel>], iteration_bounds = array<i64: 1>, scalar_prefetch = 0 : i64, scratch_operands = 0 : i64, tpu.core_type = #tpu.core_type<tc>, window_params = [{transform_indices = @transform_0, window_bounds = array<i64: 40, 64>}, {pipeline_mode = #tpu.pipeline_mode<synchronous>, transform_indices = @transform_1, window_bounds = array<i64: 64, 256>}, {transform_indices = @transform_2, window_bounds = array<i64: 40, 128>}]} {
    %c0 = arith.constant 0 : index
    %c0_0 = arith.constant 0 : index
    %0 = vector.load %arg1[%c0, %c0_0] : memref<40x64xf32, #tpu.memory_space<vmem>>, vector<40x64xf32>
    %c0_1 = arith.constant 0 : index
    %c0_2 = arith.constant 0 : index
    %1 = vector.load %arg2[%c0_1, %c0_2] : memref<64x256xf32, #tpu.memory_space<vmem>>, vector<64x256xf32>
    %cst = arith.constant dense<0.000000e+00> : vector<40x256xf32>
    %2 = tpu.matmul %0, %1, %cst {dimension_numbers = #tpu.dot_dimension_numbers<[1], [0], [0], [1], [0, 0, 1, 1], [], []>} : vector<40x64xf32>, vector<64x256xf32>, vector<40x256xf32> -> vector<40x256xf32>
    %3 = vector.extract_strided_slice %2 {offsets = [0, 0], sizes = [40, 128], strides = [1, 1]} : vector<40x256xf32> to vector<40x128xf32>
    %4 = vector.extract_strided_slice %2 {offsets = [0, 128], sizes = [40, 128], strides = [1, 1]} : vector<40x256xf32> to vector<40x128xf32>
    %5 = arith.mulf %3, %3 : vector<40x128xf32>
    %6 = arith.mulf %4, %4 : vector<40x128xf32>
    %7 = arith.addf %5, %6 : vector<40x128xf32>
    %cst_3 = arith.constant 1.000000e-07 : f32
    %8 = vector.broadcast %cst_3 : f32 to vector<40x128xf32>
    %9 = arith.maximumf %7, %8 : vector<40x128xf32>
    %10 = math.sqrt %9 : vector<40x128xf32>
    %c0_4 = arith.constant 0 : index
    %c0_5 = arith.constant 0 : index
    %11 = vector.load %arg3[%c0_4, %c0_5] : memref<40x128xf32, #tpu.memory_space<vmem>>, vector<40x128xf32>
    tpu.vector_store %arg3[%c0_4, %c0_5], %10 {strides = array<i32>} : memref<40x128xf32, #tpu.memory_space<vmem>>, vector<40x128xf32>,
    return
  }
  func.func @transform_0(%arg0: i32) -> (i32, i32) {
    %c0_i32 = arith.constant 0 : i32
    %c0_i32_0 = arith.constant 0 : i32
    return %arg0, %c0_i32 : i32, i32
  }
  func.func @transform_1(%arg0: i32) -> (i32, i32) {
    %c0_i32 = arith.constant 0 : i32
    %c0_i32_0 = arith.constant 0 : i32
    %c0_i32_1 = arith.constant 0 : i32
    return %c0_i32, %c0_i32_0 : i32, i32
  }
  func.func @transform_2(%arg0: i32) -> (i32, i32) {
    %c0_i32 = arith.constant 0 : i32
    %c0_i32_0 = arith.constant 0 : i32
    return %arg0, %c0_i32 : i32, i32
  }
}

</mosaic_0001>

<llo_original>
// kernel: _lambda_.16
$region0: #{_lambda_.16}
  #allocation0 [shape = 'u32[]', space=smem, size = 0x4, offset = 0x4, fixed_abs, tag = 'smem constant byte address 0x4 - core index']
  #allocation1 [shape = 'u32[144,128]{1,0:T(1,128)}', space=vmem, size = 0x12000, scoped, tag = 'internal scratch']
  %s0 = inlined_call_operand.vmem [shape: f32[72,32], index: 0, kind: input, shape index: {}]
  %s1 = inlined_call_operand.vmem [shape: f32[32,256], index: 1, kind: input, shape index: {}]
  %s2 = inlined_call_operand.vmem [shape: f32[72,128], index: 2, kind: output, shape index: {}]
  %s3 = sld [smem:[#allocation0]]
  $region18: #{_lambda_.16} parent=0
    _
  %s5 = ssub.s32 1, %s3
  %s6 = scalar_select 0, %s5, %s3
  // Predicated region
  $region2: #{_lambda_.16} parent=0 // pred_check
    _
  $region3: #{_lambda_.16} parent=0 // pred_check_branch
    %8 = sbr.rel (0) target = $region5
  $region4: #{_lambda_.16} parent=0 // pred_region
    _
  $region5: #{_lambda_.16} parent=0 // pred_fallthru
    _
  // Predicated region
  $region6: #{_lambda_.16} parent=0 // pred_check
    _
  $region7: #{_lambda_.16} parent=0 // pred_check_branch
    %10 = sbr.rel (0) target = $region9
  $region8: #{_lambda_.16} parent=0 // pred_region
    _
  $region9: #{_lambda_.16} parent=0 // pred_fallthru
    _
  %v11 = vld [vmem:[%s0] sm:$0xff]
  %v12 = vld [vmem:[%s0 + $0x8] sm:$0xff]
  %v13 = vld [vmem:[%s0 + $0x10] sm:$0xff]
  %v14 = vld [vmem:[%s0 + $0x18] sm:$0xff]
  %v15 = vld [vmem:[%s0 + $0x20] sm:$0xff]
  %v16 = vld [vmem:[%s0 + $0x28] sm:$0xff]
  %v17 = vld [vmem:[%s0 + $0x30] sm:$0xff]
  %v18 = vld [vmem:[%s0 + $0x38] sm:$0xff]
  %v19 = vld [vmem:[%s0 + $0x40] sm:$0xff]
  %v20 = vld [vmem:[%s1] sm:$0xff]
  %v21 = vld [vmem:[%s1 + $0x8] sm:$0xff]
  %v22 = vld [vmem:[%s1 + $0x10] sm:$0xff]
  %v23 = vld [vmem:[%s1 + $0x18] sm:$0xff]
  %v24 = vld [vmem:[%s1 + $0x20] sm:$0xff]
  %v25 = vld [vmem:[%s1 + $0x28] sm:$0xff]
  %v26 = vld [vmem:[%s1 + $0x30] sm:$0xff]
  %v27 = vld [vmem:[%s1 + $0x38] sm:$0xff]
  %vm28 = vcmask 261120
  %v30 = vsel %vm28, %v11, 0
  %v33 = vsel %vm28, %v12, 0
  %v36 = vsel %vm28, %v13, 0
  %v39 = vsel %vm28, %v14, 0
  %v42 = vsel %vm28, %v15, 0
  %v45 = vsel %vm28, %v16, 0
  %v48 = vsel %vm28, %v17, 0
  %v51 = vsel %vm28, %v18, 0
  %v54 = vsel %vm28, %v19, 0
  %56 = vmatprep.subr.mxu0 0.0
  %57 = vmatpush1.msra.mxu0 0.0
  %58 = vmatprep.subr.mxu0 0.0
  %59 = vmatpush1.msra.mxu0 0.0
  %60 = vmatprep.subr.mxu0 0.0
  %61 = vmatpush1.msra.mxu0 0.0
  %62 = vmatprep.subr.mxu0 0.0
  %63 = vmatpush1.msra.mxu0 0.0
  %64 = vmatprep.subr.mxu0 0.0
  %65 = vmatpush1.msra.mxu0 0.0
  %66 = vmatprep.subr.mxu0 0.0
  %67 = vmatpush1.msra.mxu0 0.0
  %68 = vmatprep.subr.mxu0 0.0
  %69 = vmatpush1.msra.mxu0 0.0
  %70 = vmatprep.subr.mxu0 0.0
  %71 = vmatpush1.msra.mxu0 0.0
  %72 = vmatprep.subr.mxu0 0.0
  %73 = vmatpush1.msra.mxu0 0.0
  %74 = vmatprep.subr.mxu0 0.0
  %75 = vmatpush1.msra.mxu0 0.0
  %76 = vmatprep.subr.mxu0 0.0
  %77 = vmatpush1.msra.mxu0 0.0
  %78 = vmatprep.subr.mxu0 0.0
  %79 = vmatpush1.msra.mxu0 0.0
  %80 = vmatprep.subr.mxu0 %v27
  %81 = vmatpush1.msra.mxu0 %v26
  %82 = vmatprep.subr.mxu0 %v25
  %83 = vmatpush1.msra.mxu0 %v24
  %84 = vmatprep.subr.mxu0 %v23
  %85 = vmatpush1.msra.mxu0 %v22
  %86 = vmatprep.subr.mxu0 %v21
  %87 = vmatpush1.msra.mxu0 %v20
  %88 = vmatprep.subr.mxu0 0.0
  %89 = vmatpush2.msra.mxu0 0.0
  %90 = vmatprep.subr.mxu0 0.0
  %91 = vmatpush2.msra.mxu0 0.0
  %92 = vmatprep.subr.mxu0 0.0
  %93 = vmatpush2.msra.mxu0 0.0
  %94 = vmatprep.subr.mxu0 0.0
  %95 = vmatpush2.msra.mxu0 0.0
  %96 = vmatprep.subr.mxu0 0.0
  %97 = vmatpush2.msra.mxu0 0.0
  %98 = vmatprep.subr.mxu0 0.0
  %99 = vmatpush2.msra.mxu0 0.0
  %100 = vmatprep.subr.mxu0 0.0
  %101 = vmatpush2.msra.mxu0 0.0
  %102 = vmatprep.subr.mxu0 0.0
  %103 = vmatpush2.msra.mxu0 0.0
  %104 = vmatprep.subr.mxu0 0.0
  %105 = vmatpush2.msra.mxu0 0.0
  %106 = vmatprep.subr.mxu0 0.0
  %107 = vmatpush2.msra.mxu0 0.0
  %108 = vmatprep.subr.mxu0 0.0
  %109 = vmatpush2.msra.mxu0 0.0
  %110 = vmatprep.subr.mxu0 0.0
  %111 = vmatpush2.msra.mxu0 0.0
  %112 = vmatprep.subr.mxu0 0.0
  %113 = vmatpush2.msra.mxu0 0.0
  %114 = vmatprep.subr.mxu0 0.0
  %115 = vmatpush2.msra.mxu0 0.0
  %116 = vmatprep.subr.mxu0 0.0
  %117 = vmatpush2.msra.mxu0 0.0
  %118 = vmatprep.subr.mxu0 0.0
  %119 = vmatpush2.msra.mxu0 0.0
  %120 = vmatprep.mubr.f32.mxu0 0.0
  %121 = vmatmul.mubr.f32.gmra.mxu0 %v30
  %v122 = vpop.f32.mrf.mxu0
  %v123 = vadd.f32 0.0, %v122
  %v124 = vpop.f32.mrf.mxu0
  %v125 = vadd.f32 0.0, %v124
  %126 = vmatprep.mubr.f32.mxu0 0.0
  %127 = vmatmul.mubr.f32.gmra.mxu0 %v33
  %v128 = vpop.f32.mrf.mxu0
  %v129 = vadd.f32 0.0, %v128
  %v130 = vpop.f32.mrf.mxu0
  %v131 = vadd.f32 0.0, %v130
  %132 = vmatprep.mubr.f32.mxu0 0.0
  %133 = vmatmul.mubr.f32.gmra.mxu0 %v36
  %v134 = vpop.f32.mrf.mxu0
  %v135 = vadd.f32 0.0, %v134
  %v136 = vpop.f32.mrf.mxu0
  %v137 = vadd.f32 0.0, %v136
  %138 = vmatprep.mubr.f32.mxu0 0.0
  %139 = vmatmul.mubr.f32.gmra.mxu0 %v39
  %v140 = vpop.f32.mrf.mxu0
  %v141 = vadd.f32 0.0, %v140
  %v142 = vpop.f32.mrf.mxu0
  %v143 = vadd.f32 0.0, %v142
  %144 = vmatprep.mubr.f32.mxu0 0.0
  %145 = vmatmul.mubr.f32.gmra.mxu0 %v42
  %v146 = vpop.f32.mrf.mxu0
  %v147 = vadd.f32 0.0, %v146
  %v148 = vpop.f32.mrf.mxu0
  %v149 = vadd.f32 0.0, %v148
  %150 = vmatprep.mubr.f32.mxu0 0.0
  %151 = vmatmul.mubr.f32.gmra.mxu0 %v45
  %v152 = vpop.f32.mrf.mxu0
  %v153 = vadd.f32 0.0, %v152
  %v154 = vpop.f32.mrf.mxu0
  %v155 = vadd.f32 0.0, %v154
  %156 = vmatprep.mubr.f32.mxu0 0.0
  %157 = vmatmul.mubr.f32.gmra.mxu0 %v48
  %v158 = vpop.f32.mrf.mxu0
  %v159 = vadd.f32 0.0, %v158
  %v160 = vpop.f32.mrf.mxu0
  %v161 = vadd.f32 0.0, %v160
  %162 = vmatprep.mubr.f32.mxu0 0.0
  %163 = vmatmul.mubr.f32.gmra.mxu0 %v51
  %v164 = vpop.f32.mrf.mxu0
  %v165 = vadd.f32 0.0, %v164
  %v166 = vpop.f32.mrf.mxu0
  %v167 = vadd.f32 0.0, %v166
  %168 = vmatprep.mubr.f32.mxu0 0.0
  %169 = vmatmul.mubr.f32.gmra.mxu0 %v54
  %v170 = vpop.f32.mrf.mxu0
  %v171 = vadd.f32 0.0, %v170
  %v172 = vpop.f32.mrf.mxu0
  %v173 = vadd.f32 0.0, %v172
  %174 = vdwg.mxu0
  %v175 = vmul.f32 %v123, %v123
  %v176 = vmul.f32 %v129, %v129
  %v177 = vmul.f32 %v135, %v135
  %v178 = vmul.f32 %v141, %v141
  %v179 = vmul.f32 %v147, %v147
  %v180 = vmul.f32 %v153, %v153
  %v181 = vmul.f32 %v159, %v159
  %v182 = vmul.f32 %v165, %v165
  %v183 = vmul.f32 %v171, %v171
  %v184 = vmul.f32 %v125, %v125
  %v185 = vmul.f32 %v131, %v131
  %v186 = vmul.f32 %v137, %v137
  %v187 = vmul.f32 %v143, %v143
  %v188 = vmul.f32 %v149, %v149
  %v189 = vmul.f32 %v155, %v155
  %v190 = vmul.f32 %v161, %v161
  %v191 = vmul.f32 %v167, %v167
  %v192 = vmul.f32 %v173, %v173
  %v193 = vadd.f32 %v175, %v184
  %v194 = vadd.f32 %v176, %v185
  %v195 = vadd.f32 %v177, %v186
  %v196 = vadd.f32 %v178, %v187
  %v197 = vadd.f32 %v179, %v188
  %v198 = vadd.f32 %v180, %v189
  %v199 = vadd.f32 %v181, %v190
  %v200 = vadd.f32 %v182, %v191
  %v201 = vadd.f32 %v183, %v192
  %v202 = vmax.f32 %v193, 1e-07
  %v203 = vmax.f32 %v194, 1e-07
  %v204 = vmax.f32 %v195, 1e-07
  %v205 = vmax.f32 %v196, 1e-07
  %v206 = vmax.f32 %v197, 1e-07
  %v207 = vmax.f32 %v198, 1e-07
  %v208 = vmax.f32 %v199, 1e-07
  %v209 = vmax.f32 %v200, 1e-07
  %v210 = vmax.f32 %v201, 1e-07
  %v211 = vrsqrt.pop %v202
  %v212 = vmul.f32 %v202, %v211
  %vm213 = vcmp.eq.f32.partialorder %v202, inf
  %v214 = vsel %vm213, %v202, %v212
  %vm215 = vcmp.eq.f32.partialorder %v202, 0.0
  %v216 = vand.u32 %v202, 2147483648
  %v217 = vsel %vm215, %v216, %v214
  %v218 = vrsqrt.pop %v203
  %v219 = vmul.f32 %v203, %v218
  %vm220 = vcmp.eq.f32.partialorder %v203, inf
  %v221 = vsel %vm220, %v203, %v219
  %vm222 = vcmp.eq.f32.partialorder %v203, 0.0
  %v223 = vand.u32 %v203, 2147483648
  %v224 = vsel %vm222, %v223, %v221
  %v225 = vrsqrt.pop %v204
  %v226 = vmul.f32 %v204, %v225
  %vm227 = vcmp.eq.f32.partialorder %v204, inf
  %v228 = vsel %vm227, %v204, %v226
  %vm229 = vcmp.eq.f32.partialorder %v204, 0.0
  %v230 = vand.u32 %v204, 2147483648
  %v231 = vsel %vm229, %v230, %v228
  %v232 = vrsqrt.pop %v205
  %v233 = vmul.f32 %v205, %v232
  %vm234 = vcmp.eq.f32.partialorder %v205, inf
  %v235 = vsel %vm234, %v205, %v233
  %vm236 = vcmp.eq.f32.partialorder %v205, 0.0
  %v237 = vand.u32 %v205, 2147483648
  %v238 = vsel %vm236, %v237, %v235
  %v239 = vrsqrt.pop %v206
  %v240 = vmul.f32 %v206, %v239
  %vm241 = vcmp.eq.f32.partialorder %v206, inf
  %v242 = vsel %vm241, %v206, %v240
  %vm243 = vcmp.eq.f32.partialorder %v206, 0.0
  %v244 = vand.u32 %v206, 2147483648
  %v245 = vsel %vm243, %v244, %v242
  %v246 = vrsqrt.pop %v207
  %v247 = vmul.f32 %v207, %v246
  %vm248 = vcmp.eq.f32.partialorder %v207, inf
  %v249 = vsel %vm248, %v207, %v247
  %vm250 = vcmp.eq.f32.partialorder %v207, 0.0
  %v251 = vand.u32 %v207, 2147483648
  %v252 = vsel %vm250, %v251, %v249
  %v253 = vrsqrt.pop %v208
  %v254 = vmul.f32 %v208, %v253
  %vm255 = vcmp.eq.f32.partialorder %v208, inf
  %v256 = vsel %vm255, %v208, %v254
  %vm257 = vcmp.eq.f32.partialorder %v208, 0.0
  %v258 = vand.u32 %v208, 2147483648
  %v259 = vsel %vm257, %v258, %v256
  %v260 = vrsqrt.pop %v209
  %v261 = vmul.f32 %v209, %v260
  %vm262 = vcmp.eq.f32.partialorder %v209, inf
  %v263 = vsel %vm262, %v209, %v261
  %vm264 = vcmp.eq.f32.partialorder %v209, 0.0
  %v265 = vand.u32 %v209, 2147483648
  %v266 = vsel %vm264, %v265, %v263
  %v267 = vrsqrt.pop %v210
  %v268 = vmul.f32 %v210, %v267
  %vm269 = vcmp.eq.f32.partialorder %v210, inf
  %v270 = vsel %vm269, %v210, %v268
  %vm271 = vcmp.eq.f32.partialorder %v210, 0.0
  %v272 = vand.u32 %v210, 2147483648
  %v273 = vsel %vm271, %v272, %v270
  %274 = vst [vmem:[%s2] sm:$0xff] %v217
  %275 = vst [vmem:[%s2 + $0x8] sm:$0xff] %v224
  %276 = vst [vmem:[%s2 + $0x10] sm:$0xff] %v231
  %277 = vst [vmem:[%s2 + $0x18] sm:$0xff] %v238
  %278 = vst [vmem:[%s2 + $0x20] sm:$0xff] %v245
  %279 = vst [vmem:[%s2 + $0x28] sm:$0xff] %v252
  %280 = vst [vmem:[%s2 + $0x30] sm:$0xff] %v259
  %281 = vst [vmem:[%s2 + $0x38] sm:$0xff] %v266
  %282 = vst [vmem:[%s2 + $0x40] sm:$0xff] %v273
  // Predicated region
  $region10: #{_lambda_.16} parent=0 // pred_check
    _
  $region11: #{_lambda_.16} parent=0 // pred_check_branch
    %284 = sbr.rel (0) target = $region13
  $region12: #{_lambda_.16} parent=0 // pred_region
    _
  $region13: #{_lambda_.16} parent=0 // pred_fallthru
    _
  // Predicated region
  $region14: #{_lambda_.16} parent=0 // pred_check
    _
  $region15: #{_lambda_.16} parent=0 // pred_check_branch
    %286 = sbr.rel (0) target = $region17
  $region16: #{_lambda_.16} parent=0 // pred_region
    _
  $region17: #{_lambda_.16} parent=0 // pred_fallthru
    _

// kernel: _lambda_.17
$region0: #{_lambda_.17}
  #allocation0 [shape = 'u32[]', space=smem, size = 0x4, offset = 0x4, fixed_abs, tag = 'smem constant byte address 0x4 - core index']
  #allocation1 [shape = 'u32[144,128]{1,0:T(1,128)}', space=vmem, size = 0x12000, scoped, tag = 'internal scratch']
  #allocation2 [shape = 'f32[1,1]{1,0:T(1,128)S(1)}', space=vmem, size = 0x200, scoped, tag = 'scoped memory for _lambda_.17']
  %s0 = inlined_call_operand.vmem [shape: bf16[16,1536], index: 0, kind: input, shape index: {}]
  %s1 = inlined_call_operand.vmem [shape: bf16[1,16], index: 1, kind: input, shape index: {}]
  %s2 = inlined_call_operand.<no memory space> [shape: f32[1,1], index: 2, kind: input, shape index: {}]
  %s3 = inlined_call_operand.vmem [shape: f32[1,1536], index: 3, kind: output, shape index: {}]
  %s4 = sld [smem:[#allocation0]]
  $region68: #{_lambda_.17} parent=0
    _
  %s6 = ssub.s32 1, %s4
  %s7 = scalar_select 0, %s6, %s4
  %v8 = vstv %s2
  %9 = vst [vmem:[#allocation2] sm:$0x1] %v8
  $region1: #{_lambda_.17} parent=0
    #allocation3 [shape = 'u8[32768]{0}', space=vmem, size = 0x8000, scoped, tag = 'input window, operand 0']
    loop: start=0, step=1, limit=5
    $region2: #{_lambda_.17} parent=1 // loop_pre_header
      _
    $region3: #{_lambda_.17} parent=1 // loop_header
      %s11 = sphi 0, %s15
      %p12 = scmp.ge.s32.totalorder %s11, 5
      %s21 = sphi 0, %s23
      %s24 = sphi 0, %s21
      %s25 = sphi 0, %s24
      %s41 = sphi 0, %s25
      %s45 = sphi 0, %s45
      %s47 = sphi 0, %s45
      %s48 = sphi 0, %s47
      %s62 = sphi 0, %s48
      %s66 = sphi 0, %s66
      %s68 = sphi 0, %s66
      %s69 = sphi 0, %s68
      %s83 = sphi 0, %s69
      %s89 = sphi 0, %s91
      %s92 = sphi 0, %s89
      %s93 = sphi 0, %s92
      %s109 = sphi 0, %s93
    $region4: #{_lambda_.17} parent=1 // loop_header_branch
      %14 = sbr.rel (%p12) target = $region8
    $region5: #{_lambda_.17} parent=1 // loop_body
      %s16 = ssub.s32 %s11, 1
      %s17 = ssub.s32 %s11, 2
      %s18 = sadd.s32 %s11, 1
      %s19 = ssub.s32 %s11, %s18
      %p20 = scmp.eq.s32.totalorder %s19, 0
      %s22 = sadd.s32 %s21, 1
      %s23 = scalar_select %p20, %s21, %s22
      %p26 = pneg %p20
      %p27 = scmp.eq.s32.totalorder %s11, 2
      %p28 = por %p26, %p27
      %p29 = scmp.ne.s32.totalorder %s21, %s24
      %p30 = scmp.eq.s32.totalorder %s11, 0
      %p31 = por %p29, %p30
      %p32 = scmp.ne.s32.totalorder %s21, %s24
      %p33 = scmp.eq.s32.totalorder %s16, 2
      %p34 = por %p32, %p33
      %p35 = scmp.ne.s32.totalorder %s24, %s25
      %p36 = scmp.eq.s32.totalorder %s16, 0
      %p37 = por %p35, %p36
      %p38 = scmp.ne.s32.totalorder %s24, %s25
      %p39 = scmp.eq.s32.totalorder %s17, 2
      %p40 = por %p38, %p39
      %p42 = scmp.ne.s32.totalorder %s25, %s41
      %p43 = scmp.eq.s32.totalorder %s17, 0
      %p44 = por %p42, %p43
      %s46 = sadd.s32 %s45, 1
      %p49 = scmp.eq.s32.totalorder %s11, 2
      %p50 = scmp.ne.s32.totalorder %s45, %s47
      %p51 = scmp.eq.s32.totalorder %s11, 0
      %p52 = por %p50, %p51
      %p53 = scmp.ne.s32.totalorder %s45, %s47
      %p54 = scmp.eq.s32.totalorder %s16, 2
      %p55 = por %p53, %p54
      %p56 = scmp.ne.s32.totalorder %s47, %s48
      %p57 = scmp.eq.s32.totalorder %s16, 0
      %p58 = por %p56, %p57
      %p59 = scmp.ne.s32.totalorder %s47, %s48
      %p60 = scmp.eq.s32.totalorder %s17, 2
      %p61 = por %p59, %p60
      %p63 = scmp.ne.s32.totalorder %s48, %s62
      %p64 = scmp.eq.s32.totalorder %s17, 0
      %p65 = por %p63, %p64
      %s67 = sadd.s32 %s66, 1
      %p70 = scmp.eq.s32.totalorder %s11, 2
      %p71 = scmp.ne.s32.totalorder %s66, %s68
      %p72 = scmp.eq.s32.totalorder %s11, 0
      %p73 = por %p71, %p72
      %p74 = scmp.ne.s32.totalorder %s66, %s68
      %p75 = scmp.eq.s32.totalorder %s16, 2
      %p76 = por %p74, %p75
      %p77 = scmp.ne.s32.totalorder %s68, %s69
      %p78 = scmp.eq.s32.totalorder %s16, 0
      %p79 = por %p77, %p78
      %p80 = scmp.ne.s32.totalorder %s68, %s69
      %p81 = scmp.eq.s32.totalorder %s17, 2
      %p82 = por %p80, %p81
      %p84 = scmp.ne.s32.totalorder %s69, %s83
      %p85 = scmp.eq.s32.totalorder %s17, 0
      %p86 = por %p84, %p85
      %s87 = ssub.s32 %s11, %s18
      %p88 = scmp.eq.s32.totalorder %s87, 0
      %s90 = sadd.s32 %s89, 1
      %s91 = scalar_select %p88, %s89, %s90
      %p94 = pneg %p88
      %p95 = scmp.eq.s32.totalorder %s11, 2
      %p96 = por %p94, %p95
      %p97 = scmp.ne.s32.totalorder %s89, %s92
      %p98 = scmp.eq.s32.totalorder %s11, 0
      %p99 = por %p97, %p98
      %p100 = scmp.ne.s32.totalorder %s89, %s92
      %p101 = scmp.eq.s32.totalorder %s16, 2
      %p102 = por %p100, %p101
      %p103 = scmp.ne.s32.totalorder %s92, %s93
      %p104 = scmp.eq.s32.totalorder %s16, 0
      %p105 = por %p103, %p104
      %p106 = scmp.ne.s32.totalorder %s92, %s93
      %p107 = scmp.eq.s32.totalorder %s17, 2
      %p108 = por %p106, %p107
      %p110 = scmp.ne.s32.totalorder %s93, %s109
      %p111 = scmp.eq.s32.totalorder %s17, 0
      %p112 = por %p110, %p111
      %p113 = scmp.le.s32.totalorder 1, %s11
      %p114 = scmp.lt.s32.totalorder %s11, 4
      %p115 = pnand %p113, %p114
      %p116 = pneg %p115
      // Predicated region
      $region9: #{_lambda_.17} parent=5 // pred_check
        _
      $region10: #{_lambda_.17} parent=5 // pred_check_branch
        %118 = sbr.rel (%p115) target = $region12
      $region11: #{_lambda_.17} parent=5 // pred_region
        %s119 = ssub.s32 %s11, 1
        // Predicated region
        $region13: #{_lambda_.17} parent=11 // pred_check
          %p120 = pneg %p58
        $region14: #{_lambda_.17} parent=11 // pred_check_branch
          %122 = sbr.rel (%p120) target = $region16
        $region15: #{_lambda_.17} parent=11 // pred_region
          _
        $region16: #{_lambda_.17} parent=11 // pred_fallthru
          _
        // Predicated region
        $region17: #{_lambda_.17} parent=11 // pred_check
          %p123 = pneg %p79
        $region18: #{_lambda_.17} parent=11 // pred_check_branch
          %125 = sbr.rel (%p123) target = $region20
        $region19: #{_lambda_.17} parent=11 // pred_region
          _
        $region20: #{_lambda_.17} parent=11 // pred_fallthru
          _
      $region12: #{_lambda_.17} parent=5 // pred_fallthru
        _
      %p126 = scmp.lt.s32.totalorder %s11, 3
      // Predicated region
      $region21: #{_lambda_.17} parent=5 // pred_check
        %p127 = pneg %p126
      $region22: #{_lambda_.17} parent=5 // pred_check_branch
        %129 = sbr.rel (%p127) target = $region24
      $region23: #{_lambda_.17} parent=5 // pred_region
        // Predicated region
        $region25: #{_lambda_.17} parent=23 // pred_check
          %p130 = pneg %p31
        $region26: #{_lambda_.17} parent=23 // pred_check_branch
          %132 = sbr.rel (%p130) target = $region28
        $region27: #{_lambda_.17} parent=23 // pred_region
          %s133 = sand.u32 %s21, 1
          %s134 = sand.u32 %s21, 1
          %s135 = smul.addr %s134, 32
          %s136 = scalar_lea.vmem [#allocation3], %s135
          %s137 = smul.u32 4, %s11
          %s138 = smul.addr %s137, 4
          %s139 = scalar_lea.vmem %s0, %s138
          // Predicated region
          $region29: #{_lambda_.17} parent=27 // pred_check
            _
          $region30: #{_lambda_.17} parent=27 // pred_check_branch
            %141 = sbr.rel (0) target = $region32
          $region31: #{_lambda_.17} parent=27 // pred_region
            // Predicated region
            $region33: #{_lambda_.17} parent=31 // pred_check
              _
            $region34: #{_lambda_.17} parent=31 // pred_check_branch
              %143 = sbr.rel (0) target = $region36
            $region35: #{_lambda_.17} parent=31 // pred_region
              loop: start=0, step=1, limit=1
              $region37: #{_lambda_.17} parent=35 // loop_pre_header
                _
              $region38: #{_lambda_.17} parent=35 // loop_header
                %s145 = sphi 0, %s149
                %p146 = scmp.ge.s32.totalorder %s145, 1
                %s150 = sphi %s139, %s139
                %s151 = sphi %s136, %s136
              $region39: #{_lambda_.17} parent=35 // loop_header_branch
                %148 = sbr.rel (%p146) target = $region43
              $region40: #{_lambda_.17} parent=35 // loop_body
                %v152 = vld [vmem:[%s150] sm:$0xff]
                %153 = vst [vmem:[%s151] sm:$0xff] %v152
                %v154 = vld [vmem:[%s150 + $0x8] sm:$0xff]
                %155 = vst [vmem:[%s151 + $0x8] sm:$0xff] %v154
                %v156 = vld [vmem:[%s150 + $0x30] sm:$0xff]
                %157 = vst [vmem:[%s151 + $0x10] sm:$0xff] %v156
                %v158 = vld [vmem:[%s150 + $0x38] sm:$0xff]
                %159 = vst [vmem:[%s151 + $0x18] sm:$0xff] %v158
              $region41: #{_lambda_.17} parent=35 // loop_footer
                %s149 = sadd.s32 1, %s145
              $region42: #{_lambda_.17} parent=35 // loop_footer_branch
                %144 = sbr.rel target = $region38
              $region43: #{_lambda_.17} parent=35 // loop_exit
                _
            $region36: #{_lambda_.17} parent=31 // pred_fallthru
              _
            // Predicated region
            $region44: #{_lambda_.17} parent=31 // pred_check
              _
            $region45: #{_lambda_.17} parent=31 // pred_check_branch
              %161 = sbr.rel target = $region47
            $region46: #{_lambda_.17} parent=31 // pred_region
              _
            $region47: #{_lambda_.17} parent=31 // pred_fallthru
              _
          $region32: #{_lambda_.17} parent=27 // pred_fallthru
            _
          %162 = vnop
        $region28: #{_lambda_.17} parent=23 // pred_fallthru
          _
      $region24: #{_lambda_.17} parent=5 // pred_fallthru
        _
      %p163 = scmp.le.s32.totalorder 1, %s11
      %p164 = scmp.lt.s32.totalorder %s11, 4
      %p165 = pnand %p163, %p164
      %p166 = pneg %p165
      // Predicated region
      $region48: #{_lambda_.17} parent=5 // pred_check
        _
      $region49: #{_lambda_.17} parent=5 // pred_check_branch
        %168 = sbr.rel (%p165) target = $region51
      $region50: #{_lambda_.17} parent=5 // pred_region
        %s169 = ssub.s32 %s11, 1
        %s170 = sand.u32 %s24, 1
        %s171 = sand.u32 %s24, 1
        %s172 = smul.addr %s171, 32
        %s173 = scalar_lea.vmem [#allocation3], %s172
        // Predicated region
        $region52: #{_lambda_.17} parent=50 // pred_check
          %p174 = pneg %p37
        $region53: #{_lambda_.17} parent=50 // pred_check_branch
          %176 = sbr.rel (%p174) target = $region55
        $region54: #{_lambda_.17} parent=50 // pred_region
          _
        $region55: #{_lambda_.17} parent=50 // pred_fallthru
          _
        %s177 = sand.u32 %s24, 1
        %s178 = sand.u32 %s24, 1
        %s179 = smul.addr %s178, 32
        %s180 = scalar_lea.vmem [#allocation3], %s179
        %p181 = pneg %p37
        %p182 = pneg %p34
        %p183 = pneg %p58
        %p184 = pneg %p55
        %p185 = pneg %p79
        %p186 = pneg %p76
        %p187 = pneg %p105
        %p188 = pneg %p102
        %s189 = smul.u32 4, %s16
        %p190 = scmp.lt.s32.totalorder %s189, 11
        %s191 = scalar_select %p190, %s189, 11
        %s192 = scalar_lea.vmem %s3, %s191
        %s193 = smul.u32 4, %s16
        %s194 = smul.u32 4, %s16
        %p195 = scmp.lt.s32.totalorder %s194, 11
        %s196 = scalar_select %p195, %s194, 11
        %s197 = scalar_lea.vmem %s3, %s196
        %s198 = smul.u32 4, %s16
        %v200 = vld [vmem:[%s1] sm:$0x1]
        %v201 = vld [vmem:[%s173] sm:$0xff]
        %v202 = vld [vmem:[%s173 + $0x8] sm:$0xff]
        %v203 = vld [vmem:[%s173 + $0x10] sm:$0xff]
        %v204 = vld [vmem:[%s173 + $0x18] sm:$0xff]
        %v205 = vld [vmem:[#allocation2] sm:$0x1]
        %207 = vset.pattern.permute.xlu0 0
        %208 = vperm.xlu0 %207, %v205
        %v209 = vpop.permute.xlu0 %208
        %v211 = vlaneseq
        %v212 = vshrl.u32 %v211, 7
        %v213 = vsub.s32 0, %v212
        %v214 = vrot.slane %v209, %v213
        %v219 = vunpack.c.l.b16 %v201
        %v220 = vunpack.c.h.b16 %v201
        %v221 = vunpack.c.l.b16 %v202
        %v222 = vunpack.c.h.b16 %v202
        %v223 = vunpack.c.l.b16 %v203
        %v224 = vunpack.c.h.b16 %v203
        %v225 = vunpack.c.l.b16 %v204
        %v226 = vunpack.c.h.b16 %v204
        %v227 = vpack.c.b16 %v223, %v219
        %v228 = vpack.c.b16 %v224, %v220
        %v229 = vpack.c.b16 %v225, %v221
        %v230 = vpack.c.b16 %v226, %v222
        %vm235 = vcmask 130048
        %v237 = vsel %vm235, %v200, 0
        %239 = vmatprep.subr.bf16.mxu0 0
        %240 = vmatpush1.bf16.msra.mxu0 0
        %241 = vmatprep.subr.bf16.mxu0 0
        %242 = vmatpush1.bf16.msra.mxu0 0
        %243 = vmatprep.subr.bf16.mxu0 0
        %244 = vmatpush1.bf16.msra.mxu0 0
        %245 = vmatprep.subr.bf16.mxu0 0
        %246 = vmatpush1.bf16.msra.mxu0 0
        %247 = vmatprep.subr.bf16.mxu0 0
        %248 = vmatpush1.bf16.msra.mxu0 0
        %249 = vmatprep.subr.bf16.mxu0 0
        %250 = vmatpush1.bf16.msra.mxu0 0
        %251 = vmatprep.subr.bf16.mxu0 0
        %252 = vmatpush1.bf16.msra.mxu0 0
        %253 = vmatprep.subr.bf16.mxu0 %v228
        %254 = vmatpush1.bf16.msra.mxu0 %v227
        %255 = vmatprep.subr.bf16.mxu0 0
        %256 = vmatpush2.bf16.msra.mxu0 0
        %257 = vmatprep.subr.bf16.mxu0 0
        %258 = vmatpush2.bf16.msra.mxu0 0
        %259 = vmatprep.subr.bf16.mxu0 0
        %260 = vmatpush2.bf16.msra.mxu0 0
        %261 = vmatprep.subr.bf16.mxu0 0
        %262 = vmatpush2.bf16.msra.mxu0 0
        %263 = vmatprep.subr.bf16.mxu0 0
        %264 = vmatpush2.bf16.msra.mxu0 0
        %265 = vmatprep.subr.bf16.mxu0 0
        %266 = vmatpush2.bf16.msra.mxu0 0
        %267 = vmatprep.subr.bf16.mxu0 0
        %268 = vmatpush2.bf16.msra.mxu0 0
        %269 = vmatprep.subr.bf16.mxu0 0
        %270 = vmatpush2.bf16.msra.mxu0 0
        %271 = vmatprep.mubr.bf16.mxu0 0
        %272 = vmatmul.mubr.bf16.gmra.mxu0 %v237
        %v273 = vpop.f32.mrf.mxu0
        %v274 = vadd.f32 %v214, %v273
        %v275 = vpop.f32.mrf.mxu0
        %v276 = vadd.f32 %v214, %v275
        %v277 = vpop.f32.mrf.mxu0
        %v278 = vpop.f32.mrf.mxu0
        %279 = vdwg.mxu0
        %280 = vmatprep.subr.bf16.mxu0 0
        %281 = vmatpush1.bf16.msra.mxu0 0
        %282 = vmatprep.subr.bf16.mxu0 0
        %283 = vmatpush1.bf16.msra.mxu0 0
        %284 = vmatprep.subr.bf16.mxu0 0
        %285 = vmatpush1.bf16.msra.mxu0 0
        %286 = vmatprep.subr.bf16.mxu0 0
        %287 = vmatpush1.bf16.msra.mxu0 0
        %288 = vmatprep.subr.bf16.mxu0 0
        %289 = vmatpush1.bf16.msra.mxu0 0
        %290 = vmatprep.subr.bf16.mxu0 0
        %291 = vmatpush1.bf16.msra.mxu0 0
        %292 = vmatprep.subr.bf16.mxu0 0
        %293 = vmatpush1.bf16.msra.mxu0 0
        %294 = vmatprep.subr.bf16.mxu0 %v230
        %295 = vmatpush1.bf16.msra.mxu0 %v229
        %296 = vmatprep.subr.bf16.mxu0 0
        %297 = vmatpush2.bf16.msra.mxu0 0
        %298 = vmatprep.subr.bf16.mxu0 0
        %299 = vmatpush2.bf16.msra.mxu0 0
        %300 = vmatprep.subr.bf16.mxu0 0
        %301 = vmatpush2.bf16.msra.mxu0 0
        %302 = vmatprep.subr.bf16.mxu0 0
        %303 = vmatpush2.bf16.msra.mxu0 0
        %304 = vmatprep.subr.bf16.mxu0 0
        %305 = vmatpush2.bf16.msra.mxu0 0
        %306 = vmatprep.subr.bf16.mxu0 0
        %307 = vmatpush2.bf16.msra.mxu0 0
        %308 = vmatprep.subr.bf16.mxu0 0
        %309 = vmatpush2.bf16.msra.mxu0 0
        %310 = vmatprep.subr.bf16.mxu0 0
        %311 = vmatpush2.bf16.msra.mxu0 0
        %312 = vmatprep.mubr.bf16.mxu0 0
        %313 = vmatmul.mubr.bf16.gmra.mxu0 %v237
        %v314 = vpop.f32.mrf.mxu0
        %v315 = vadd.f32 %v214, %v314
        %v316 = vpop.f32.mrf.mxu0
        %v317 = vadd.f32 %v214, %v316
        %v318 = vpop.f32.mrf.mxu0
        %v319 = vpop.f32.mrf.mxu0
        %320 = vdwg.mxu0
        %v325 = vcombine.low %v274, %v276
        %v326 = vcombine.low %v315, %v317
        %v328 = vunpack.c.l.s4 1966171168
        %v329 = vunpack.c.0.s8 %v328
        %v330 = vlaneseq
        %v331 = vshrl.u32 %v330, 7
        %v332 = vsub.s32 %v329, %v331
        %v333 = vrot.slane %v325, %v332
        %v335 = vunpack.c.l.s4 1966171168
        %v336 = vunpack.c.0.s8 %v335
        %v337 = vlaneseq
        %v338 = vshrl.u32 %v337, 7
        %v339 = vsub.s32 %v336, %v338
        %v340 = vrot.slane %v326, %v339
        %v341 = vcombine.low %v333, %v340
        %v343 = vunpack.c.l.s4 1966171168
        %v344 = vunpack.c.0.s8 %v343
        %v345 = vlaneseq
        %v346 = vshrl.u32 %v345, 7
        %v347 = vsub.s32 %v344, %v346
        %v348 = vrot.slane %v341, %v347
        %v350 = vlaneseq
        %vm351 = vcmp.ge.s32.totalorder %v350, 0
        %vm352 = vcmp.lt.s32.totalorder %v350, 512
        %vm353 = vmand %vm351, %vm352
        %354 = vst.msk [vmem:[%s197] sm:$0xf] %vm353, %v348
        %s355 = smul.u32 4, %s16
        %p356 = scmp.lt.s32.totalorder %s355, 11
        %s357 = scalar_select %p356, %s355, 11
        %s358 = scalar_lea.vmem %s3, %s357
        // Predicated region
        $region56: #{_lambda_.17} parent=50 // pred_check
          %p359 = pneg %p102
        $region57: #{_lambda_.17} parent=50 // pred_check_branch
          %361 = sbr.rel (%p359) target = $region59
        $region58: #{_lambda_.17} parent=50 // pred_region
          %s362 = smul.u32 4, %s16
        $region59: #{_lambda_.17} parent=50 // pred_fallthru
          _
      $region51: #{_lambda_.17} parent=5 // pred_fallthru
        _
      %p363 = scmp.le.s32.totalorder 2, %s11
      // Predicated region
      $region60: #{_lambda_.17} parent=5 // pred_check
        %p364 = pneg %p363
      $region61: #{_lambda_.17} parent=5 // pred_check_branch
        %366 = sbr.rel (%p364) target = $region63
      $region62: #{_lambda_.17} parent=5 // pred_region
        %s367 = ssub.s32 %s11, 2
        // Predicated region
        $region64: #{_lambda_.17} parent=62 // pred_check
          %p368 = pneg %p108
        $region65: #{_lambda_.17} parent=62 // pred_check_branch
          %370 = sbr.rel (%p368) target = $region67
        $region66: #{_lambda_.17} parent=62 // pred_region
          %s371 = smul.u32 4, %s17
          %p372 = scmp.lt.s32.totalorder %s371, 11
          %s373 = scalar_select %p372, %s371, 11
          %s374 = scalar_lea.vmem %s3, %s373
        $region67: #{_lambda_.17} parent=62 // pred_fallthru
          _
      $region63: #{_lambda_.17} parent=5 // pred_fallthru
        _
    $region6: #{_lambda_.17} parent=1 // loop_footer
      %s15 = sadd.s32 1, %s11
    $region7: #{_lambda_.17} parent=1 // loop_footer_branch
      %10 = sbr.rel target = $region3
    $region8: #{_lambda_.17} parent=1 // loop_exit
      _

// kernel: _lambda_.18
$region0: #{_lambda_.18}
  #allocation0 [shape = 'u32[]', space=smem, size = 0x4, offset = 0x4, fixed_abs, tag = 'smem constant byte address 0x4 - core index']
  #allocation1 [shape = 'u32[144,128]{1,0:T(1,128)}', space=vmem, size = 0x12000, scoped, tag = 'internal scratch']
  %s0 = inlined_call_operand.vmem [shape: bf16[16,384], index: 0, kind: input, shape index: {}]
  %s1 = inlined_call_operand.vmem [shape: bf16[2,16], index: 1, kind: input, shape index: {}]
  %s2 = inlined_call_operand.vmem [shape: f32[2,1], index: 2, kind: input, shape index: {}]
  %s3 = inlined_call_operand.vmem [shape: f32[2,384], index: 3, kind: output, shape index: {}]
  %s4 = sld [smem:[#allocation0]]
  $region22: #{_lambda_.18} parent=0
    _
  %s6 = ssub.s32 1, %s4
  %s7 = scalar_select 0, %s6, %s4
  // Predicated region
  $region2: #{_lambda_.18} parent=0 // pred_check
    _
  $region3: #{_lambda_.18} parent=0 // pred_check_branch
    %9 = sbr.rel (0) target = $region5
  $region4: #{_lambda_.18} parent=0 // pred_region
    _
  $region5: #{_lambda_.18} parent=0 // pred_fallthru
    _
  // Predicated region
  $region6: #{_lambda_.18} parent=0 // pred_check
    _
  $region7: #{_lambda_.18} parent=0 // pred_check_branch
    %11 = sbr.rel (0) target = $region9
  $region8: #{_lambda_.18} parent=0 // pred_region
    _
  $region9: #{_lambda_.18} parent=0 // pred_fallthru
    _
  // Predicated region
  $region10: #{_lambda_.18} parent=0 // pred_check
    _
  $region11: #{_lambda_.18} parent=0 // pred_check_branch
    %13 = sbr.rel (0) target = $region13
  $region12: #{_lambda_.18} parent=0 // pred_region
    _
  $region13: #{_lambda_.18} parent=0 // pred_fallthru
    _
  %v15 = vld [vmem:[%s1] sm:$0x1]
  %v16 = vld [vmem:[%s0] sm:$0xff]
  %v17 = vld [vmem:[%s0 + $0x8] sm:$0xf]
  %v18 = vld [vmem:[%s0 + $0xc] sm:$0xff]
  %v19 = vld [vmem:[%s0 + $0x14] sm:$0xf]
  %v20 = vld [vmem:[%s2] sm:$0x3]
  %22 = vset.pattern.permute.xlu0 0
  %23 = vperm.xlu0 %22, %v20
  %v24 = vpop.permute.xlu0 %23
  %v30 = vunpack.c.l.b16 %v16
  %v31 = vunpack.c.h.b16 %v16
  %v32 = vunpack.c.l.b16 %v17
  %v33 = vunpack.c.l.b16 %v18
  %v34 = vunpack.c.h.b16 %v18
  %v35 = vunpack.c.l.b16 %v19
  %v36 = vpack.c.b16 %v33, %v30
  %v37 = vpack.c.b16 %v34, %v31
  %v38 = vpack.c.b16 %v35, %v32
  %vm42 = vcmask 130048
  %v44 = vsel %vm42, %v15, 0
  %46 = vmatprep.subr.bf16.mxu0 0
  %47 = vmatpush1.bf16.msra.mxu0 0
  %48 = vmatprep.subr.bf16.mxu0 0
  %49 = vmatpush1.bf16.msra.mxu0 0
  %50 = vmatprep.subr.bf16.mxu0 0
  %51 = vmatpush1.bf16.msra.mxu0 0
  %52 = vmatprep.subr.bf16.mxu0 0
  %53 = vmatpush1.bf16.msra.mxu0 0
  %54 = vmatprep.subr.bf16.mxu0 0
  %55 = vmatpush1.bf16.msra.mxu0 0
  %56 = vmatprep.subr.bf16.mxu0 0
  %57 = vmatpush1.bf16.msra.mxu0 0
  %58 = vmatprep.subr.bf16.mxu0 0
  %59 = vmatpush1.bf16.msra.mxu0 0
  %60 = vmatprep.subr.bf16.mxu0 %v37
  %61 = vmatpush1.bf16.msra.mxu0 %v36
  %62 = vmatprep.subr.bf16.mxu0 0
  %63 = vmatpush2.bf16.msra.mxu0 0
  %64 = vmatprep.subr.bf16.mxu0 0
  %65 = vmatpush2.bf16.msra.mxu0 0
  %66 = vmatprep.subr.bf16.mxu0 0
  %67 = vmatpush2.bf16.msra.mxu0 0
  %68 = vmatprep.subr.bf16.mxu0 0
  %69 = vmatpush2.bf16.msra.mxu0 0
  %70 = vmatprep.subr.bf16.mxu0 0
  %71 = vmatpush2.bf16.msra.mxu0 0
  %72 = vmatprep.subr.bf16.mxu0 0
  %73 = vmatpush2.bf16.msra.mxu0 0
  %74 = vmatprep.subr.bf16.mxu0 0
  %75 = vmatpush2.bf16.msra.mxu0 0
  %76 = vmatprep.subr.bf16.mxu0 0
  %77 = vmatpush2.bf16.msra.mxu0 0
  %78 = vmatprep.mubr.bf16.mxu0 0
  %79 = vmatmul.mubr.bf16.gmra.mxu0 %v44
  %v80 = vpop.f32.mrf.mxu0
  %v81 = vadd.f32 %v24, %v80
  %v82 = vpop.f32.mrf.mxu0
  %v83 = vadd.f32 %v24, %v82
  %v84 = vpop.f32.mrf.mxu0
  %v85 = vpop.f32.mrf.mxu0
  %86 = vdwg.mxu0
  %87 = vmatprep.subr.bf16.mxu0 0
  %88 = vmatpush1.bf16.msra.mxu0 0
  %89 = vmatprep.subr.bf16.mxu0 0
  %90 = vmatpush1.bf16.msra.mxu0 0
  %91 = vmatprep.subr.bf16.mxu0 0
  %92 = vmatpush1.bf16.msra.mxu0 0
  %93 = vmatprep.subr.bf16.mxu0 0
  %94 = vmatpush1.bf16.msra.mxu0 0
  %95 = vmatprep.subr.bf16.mxu0 0
  %96 = vmatpush1.bf16.msra.mxu0 0
  %97 = vmatprep.subr.bf16.mxu0 0
  %98 = vmatpush1.bf16.msra.mxu0 0
  %99 = vmatprep.subr.bf16.mxu0 0
  %100 = vmatpush1.bf16.msra.mxu0 0
  %101 = vmatprep.subr.bf16.mxu0 0
  %102 = vmatpush1.bf16.msra.mxu0 %v38
  %103 = vmatprep.subr.bf16.mxu0 0
  %104 = vmatpush2.bf16.msra.mxu0 0
  %105 = vmatprep.subr.bf16.mxu0 0
  %106 = vmatpush2.bf16.msra.mxu0 0
  %107 = vmatprep.subr.bf16.mxu0 0
  %108 = vmatpush2.bf16.msra.mxu0 0
  %109 = vmatprep.subr.bf16.mxu0 0
  %110 = vmatpush2.bf16.msra.mxu0 0
  %111 = vmatprep.subr.bf16.mxu0 0
  %112 = vmatpush2.bf16.msra.mxu0 0
  %113 = vmatprep.subr.bf16.mxu0 0
  %114 = vmatpush2.bf16.msra.mxu0 0
  %115 = vmatprep.subr.bf16.mxu0 0
  %116 = vmatpush2.bf16.msra.mxu0 0
  %117 = vmatprep.subr.bf16.mxu0 0
  %118 = vmatpush2.bf16.msra.mxu0 0
  %119 = vmatprep.mubr.bf16.mxu0 0
  %120 = vmatmul.mubr.bf16.gmra.mxu0 %v44
  %v121 = vpop.f32.mrf.mxu0
  %v122 = vadd.f32 %v24, %v121
  %v123 = vpop.f32.mrf.mxu0
  %v124 = vpop.f32.mrf.mxu0
  %v125 = vpop.f32.mrf.mxu0
  %126 = vdwg.mxu0
  %v130 = vcombine.low %v81, %v83
  %v132 = vunpack.c.l.s4 1983009808
  %v133 = vunpack.c.0.s8 %v132
  %v134 = vlaneseq
  %v135 = vshrl.u32 %v134, 7
  %v136 = vsub.s32 %v133, %v135
  %v137 = vrot.slane %v130, %v136
  %v139 = vunpack.c.l.s4 1983009808
  %v140 = vunpack.c.0.s8 %v139
  %v141 = vlaneseq
  %v142 = vshrl.u32 %v141, 7
  %v143 = vsub.s32 %v140, %v142
  %v144 = vrot.slane %v122, %v143
  %v145 = vcombine.low %v137, %v144
  %147 = vst [vmem:[%s3] sm:$0x3f] %v145
  // Predicated region
  $region14: #{_lambda_.18} parent=0 // pred_check
    _
  $region15: #{_lambda_.18} parent=0 // pred_check_branch
    %149 = sbr.rel (0) target = $region17
  $region16: #{_lambda_.18} parent=0 // pred_region
    _
  $region17: #{_lambda_.18} parent=0 // pred_fallthru
    _
  // Predicated region
  $region18: #{_lambda_.18} parent=0 // pred_check
    _
  $region19: #{_lambda_.18} parent=0 // pred_check_branch
    %151 = sbr.rel (0) target = $region21
  $region20: #{_lambda_.18} parent=0 // pred_region
    _
  $region21: #{_lambda_.18} parent=0 // pred_fallthru
    _

// kernel: _lambda_.19
$region0: #{_lambda_.19}
  #allocation0 [shape = 'u32[]', space=smem, size = 0x4, offset = 0x4, fixed_abs, tag = 'smem constant byte address 0x4 - core index']
  #allocation1 [shape = 'u32[144,128]{1,0:T(1,128)}', space=vmem, size = 0x12000, scoped, tag = 'internal scratch']
  %s0 = inlined_call_operand.vmem [shape: bf16[32,384], index: 0, kind: input, shape index: {}]
  %s1 = inlined_call_operand.vmem [shape: bf16[4,32], index: 1, kind: input, shape index: {}]
  %s2 = inlined_call_operand.vmem [shape: f32[4,1], index: 2, kind: input, shape index: {}]
  %s3 = inlined_call_operand.vmem [shape: f32[4,384], index: 3, kind: output, shape index: {}]
  %s4 = sld [smem:[#allocation0]]
  $region22: #{_lambda_.19} parent=0
    _
  %s6 = ssub.s32 1, %s4
  %s7 = scalar_select 0, %s6, %s4
  // Predicated region
  $region2: #{_lambda_.19} parent=0 // pred_check
    _
  $region3: #{_lambda_.19} parent=0 // pred_check_branch
    %9 = sbr.rel (0) target = $region5
  $region4: #{_lambda_.19} parent=0 // pred_region
    _
  $region5: #{_lambda_.19} parent=0 // pred_fallthru
    _
  // Predicated region
  $region6: #{_lambda_.19} parent=0 // pred_check
    _
  $region7: #{_lambda_.19} parent=0 // pred_check_branch
    %11 = sbr.rel (0) target = $region9
  $region8: #{_lambda_.19} parent=0 // pred_region
    _
  $region9: #{_lambda_.19} parent=0 // pred_fallthru
    _
  // Predicated region
  $region10: #{_lambda_.19} parent=0 // pred_check
    _
  $region11: #{_lambda_.19} parent=0 // pred_check_branch
    %13 = sbr.rel (0) target = $region13
  $region12: #{_lambda_.19} parent=0 // pred_region
    _
  $region13: #{_lambda_.19} parent=0 // pred_fallthru
    _
  %v15 = vld [vmem:[%s1] sm:$0x3]
  %v16 = vld [vmem:[%s0] sm:$0xff]
  %v17 = vld [vmem:[%s0 + $0x8] sm:$0xf]
  %v18 = vld [vmem:[%s0 + $0xc] sm:$0xff]
  %v19 = vld [vmem:[%s0 + $0x14] sm:$0xf]
  %v20 = vld [vmem:[%s0 + $0x18] sm:$0xff]
  %v21 = vld [vmem:[%s0 + $0x20] sm:$0xf]
  %v22 = vld [vmem:[%s0 + $0x24] sm:$0xff]
  %v23 = vld [vmem:[%s0 + $0x2c] sm:$0xf]
  %v24 = vld [vmem:[%s2] sm:$0xf]
  %26 = vset.pattern.permute.xlu0 0
  %27 = vperm.xlu0 %26, %v24
  %v28 = vpop.permute.xlu0 %27
  %v38 = vunpack.c.l.b16 %v16
  %v39 = vunpack.c.h.b16 %v16
  %v40 = vunpack.c.l.b16 %v17
  %v41 = vunpack.c.l.b16 %v18
  %v42 = vunpack.c.h.b16 %v18
  %v43 = vunpack.c.l.b16 %v19
  %v44 = vunpack.c.l.b16 %v20
  %v45 = vunpack.c.h.b16 %v20
  %v46 = vunpack.c.l.b16 %v21
  %v47 = vunpack.c.l.b16 %v22
  %v48 = vunpack.c.h.b16 %v22
  %v49 = vunpack.c.l.b16 %v23
  %v50 = vpack.c.b16 %v41, %v38
  %v51 = vpack.c.b16 %v42, %v39
  %v52 = vpack.c.b16 %v43, %v40
  %v53 = vpack.c.b16 %v47, %v44
  %v54 = vpack.c.b16 %v48, %v45
  %v55 = vpack.c.b16 %v49, %v46
  %vm62 = vcmask 261120
  %v64 = vsel %vm62, %v15, 0
  %66 = vmatprep.subr.bf16.mxu0 0
  %67 = vmatpush1.bf16.msra.mxu0 0
  %68 = vmatprep.subr.bf16.mxu0 0
  %69 = vmatpush1.bf16.msra.mxu0 0
  %70 = vmatprep.subr.bf16.mxu0 0
  %71 = vmatpush1.bf16.msra.mxu0 0
  %72 = vmatprep.subr.bf16.mxu0 0
  %73 = vmatpush1.bf16.msra.mxu0 0
  %74 = vmatprep.subr.bf16.mxu0 0
  %75 = vmatpush1.bf16.msra.mxu0 0
  %76 = vmatprep.subr.bf16.mxu0 0
  %77 = vmatpush1.bf16.msra.mxu0 0
  %78 = vmatprep.subr.bf16.mxu0 %v54
  %79 = vmatpush1.bf16.msra.mxu0 %v53
  %80 = vmatprep.subr.bf16.mxu0 %v51
  %81 = vmatpush1.bf16.msra.mxu0 %v50
  %82 = vmatprep.subr.bf16.mxu0 0
  %83 = vmatpush2.bf16.msra.mxu0 0
  %84 = vmatprep.subr.bf16.mxu0 0
  %85 = vmatpush2.bf16.msra.mxu0 0
  %86 = vmatprep.subr.bf16.mxu0 0
  %87 = vmatpush2.bf16.msra.mxu0 0
  %88 = vmatprep.subr.bf16.mxu0 0
  %89 = vmatpush2.bf16.msra.mxu0 0
  %90 = vmatprep.subr.bf16.mxu0 0
  %91 = vmatpush2.bf16.msra.mxu0 0
  %92 = vmatprep.subr.bf16.mxu0 0
  %93 = vmatpush2.bf16.msra.mxu0 0
  %94 = vmatprep.subr.bf16.mxu0 0
  %95 = vmatpush2.bf16.msra.mxu0 0
  %96 = vmatprep.subr.bf16.mxu0 0
  %97 = vmatpush2.bf16.msra.mxu0 0
  %98 = vmatprep.mubr.bf16.mxu0 0
  %99 = vmatmul.mubr.bf16.gmra.mxu0 %v64
  %v100 = vpop.f32.mrf.mxu0
  %v101 = vadd.f32 %v28, %v100
  %v102 = vpop.f32.mrf.mxu0
  %v103 = vadd.f32 %v28, %v102
  %v104 = vpop.f32.mrf.mxu0
  %v105 = vpop.f32.mrf.mxu0
  %106 = vdwg.mxu0
  %107 = vmatprep.subr.bf16.mxu0 0
  %108 = vmatpush1.bf16.msra.mxu0 0
  %109 = vmatprep.subr.bf16.mxu0 0
  %110 = vmatpush1.bf16.msra.mxu0 0
  %111 = vmatprep.subr.bf16.mxu0 0
  %112 = vmatpush1.bf16.msra.mxu0 0
  %113 = vmatprep.subr.bf16.mxu0 0
  %114 = vmatpush1.bf16.msra.mxu0 0
  %115 = vmatprep.subr.bf16.mxu0 0
  %116 = vmatpush1.bf16.msra.mxu0 0
  %117 = vmatprep.subr.bf16.mxu0 0
  %118 = vmatpush1.bf16.msra.mxu0 0
  %119 = vmatprep.subr.bf16.mxu0 0
  %120 = vmatpush1.bf16.msra.mxu0 %v55
  %121 = vmatprep.subr.bf16.mxu0 0
  %122 = vmatpush1.bf16.msra.mxu0 %v52
  %123 = vmatprep.subr.bf16.mxu0 0
  %124 = vmatpush2.bf16.msra.mxu0 0
  %125 = vmatprep.subr.bf16.mxu0 0
  %126 = vmatpush2.bf16.msra.mxu0 0
  %127 = vmatprep.subr.bf16.mxu0 0
  %128 = vmatpush2.bf16.msra.mxu0 0
  %129 = vmatprep.subr.bf16.mxu0 0
  %130 = vmatpush2.bf16.msra.mxu0 0
  %131 = vmatprep.subr.bf16.mxu0 0
  %132 = vmatpush2.bf16.msra.mxu0 0
  %133 = vmatprep.subr.bf16.mxu0 0
  %134 = vmatpush2.bf16.msra.mxu0 0
  %135 = vmatprep.subr.bf16.mxu0 0
  %136 = vmatpush2.bf16.msra.mxu0 0
  %137 = vmatprep.subr.bf16.mxu0 0
  %138 = vmatpush2.bf16.msra.mxu0 0
  %139 = vmatprep.mubr.bf16.mxu0 0
  %140 = vmatmul.mubr.bf16.gmra.mxu0 %v64
  %v141 = vpop.f32.mrf.mxu0
  %v142 = vadd.f32 %v28, %v141
  %v143 = vpop.f32.mrf.mxu0
  %v144 = vpop.f32.mrf.mxu0
  %v145 = vpop.f32.mrf.mxu0
  %146 = vdwg.mxu0
  %v149 = vcombine.low %v101, %v103
  %151 = vst [vmem:[%s3] sm:$0xff] %v149
  %152 = vst [vmem:[%s3 + $0x8] sm:$0xf] %v142
  // Predicated region
  $region14: #{_lambda_.19} parent=0 // pred_check
    _
  $region15: #{_lambda_.19} parent=0 // pred_check_branch
    %154 = sbr.rel (0) target = $region17
  $region16: #{_lambda_.19} parent=0 // pred_region
    _
  $region17: #{_lambda_.19} parent=0 // pred_fallthru
    _
  // Predicated region
  $region18: #{_lambda_.19} parent=0 // pred_check
    _
  $region19: #{_lambda_.19} parent=0 // pred_check_branch
    %156 = sbr.rel (0) target = $region21
  $region20: #{_lambda_.19} parent=0 // pred_region
    _
  $region21: #{_lambda_.19} parent=0 // pred_fallthru
    _

// kernel: _lambda_.20
$region0: #{_lambda_.20}
  #allocation0 [shape = 'u32[]', space=smem, size = 0x4, offset = 0x4, fixed_abs, tag = 'smem constant byte address 0x4 - core index']
  #allocation1 [shape = 'u32[144,128]{1,0:T(1,128)}', space=vmem, size = 0x12000, scoped, tag = 'internal scratch']
  %s0 = inlined_call_operand.vmem [shape: bf16[48,128], index: 0, kind: input, shape index: {}]
  %s1 = inlined_call_operand.vmem [shape: bf16[8,48], index: 1, kind: input, shape index: {}]
  %s2 = inlined_call_operand.vmem [shape: f32[8,1], index: 2, kind: input, shape index: {}]
  %s3 = inlined_call_operand.vmem [shape: f32[8,128], index: 3, kind: output, shape index: {}]
  %s4 = sld [smem:[#allocation0]]
  $region22: #{_lambda_.20} parent=0
    _
  %s6 = ssub.s32 1, %s4
  %s7 = scalar_select 0, %s6, %s4
  // Predicated region
  $region2: #{_lambda_.20} parent=0 // pred_check
    _
  $region3: #{_lambda_.20} parent=0 // pred_check_branch
    %9 = sbr.rel (0) target = $region5
  $region4: #{_lambda_.20} parent=0 // pred_region
    _
  $region5: #{_lambda_.20} parent=0 // pred_fallthru
    _
  // Predicated region
  $region6: #{_lambda_.20} parent=0 // pred_check
    _
  $region7: #{_lambda_.20} parent=0 // pred_check_branch
    %11 = sbr.rel (0) target = $region9
  $region8: #{_lambda_.20} parent=0 // pred_region
    _
  $region9: #{_lambda_.20} parent=0 // pred_fallthru
    _
  // Predicated region
  $region10: #{_lambda_.20} parent=0 // pred_check
    _
  $region11: #{_lambda_.20} parent=0 // pred_check_branch
    %13 = sbr.rel (0) target = $region13
  $region12: #{_lambda_.20} parent=0 // pred_region
    _
  $region13: #{_lambda_.20} parent=0 // pred_fallthru
    _
  %v15 = vld [vmem:[%s1] sm:$0xf]
  %v16 = vld [vmem:[%s0] sm:$0xf]
  %v17 = vld [vmem:[%s0 + $0x4] sm:$0xf]
  %v18 = vld [vmem:[%s0 + $0x8] sm:$0xf]
  %v19 = vld [vmem:[%s0 + $0xc] sm:$0xf]
  %v20 = vld [vmem:[%s0 + $0x10] sm:$0xf]
  %v21 = vld [vmem:[%s0 + $0x14] sm:$0xf]
  %v22 = vld [vmem:[%s2] sm:$0xff]
  %24 = vset.pattern.permute.xlu0 0
  %25 = vperm.xlu0 %24, %v22
  %v26 = vpop.permute.xlu0 %25
  %v34 = vunpack.c.l.b16 %v16
  %v35 = vunpack.c.l.b16 %v17
  %v36 = vunpack.c.l.b16 %v18
  %v37 = vunpack.c.l.b16 %v19
  %v38 = vunpack.c.l.b16 %v20
  %v39 = vunpack.c.l.b16 %v21
  %v40 = vpack.c.b16 %v35, %v34
  %v41 = vpack.c.b16 %v37, %v36
  %v42 = vpack.c.b16 %v39, %v38
  %vm46 = vcmask 392192
  %v48 = vsel %vm46, %v15, 0
  %50 = vmatprep.subr.bf16.mxu0 0
  %51 = vmatpush1.bf16.msra.mxu0 0
  %52 = vmatprep.subr.bf16.mxu0 0
  %53 = vmatpush1.bf16.msra.mxu0 0
  %54 = vmatprep.subr.bf16.mxu0 0
  %55 = vmatpush1.bf16.msra.mxu0 0
  %56 = vmatprep.subr.bf16.mxu0 0
  %57 = vmatpush1.bf16.msra.mxu0 0
  %58 = vmatprep.subr.bf16.mxu0 0
  %59 = vmatpush1.bf16.msra.mxu0 0
  %60 = vmatprep.subr.bf16.mxu0 0
  %61 = vmatpush1.bf16.msra.mxu0 %v42
  %62 = vmatprep.subr.bf16.mxu0 0
  %63 = vmatpush1.bf16.msra.mxu0 %v41
  %64 = vmatprep.subr.bf16.mxu0 0
  %65 = vmatpush1.bf16.msra.mxu0 %v40
  %66 = vmatprep.subr.bf16.mxu0 0
  %67 = vmatpush2.bf16.msra.mxu0 0
  %68 = vmatprep.subr.bf16.mxu0 0
  %69 = vmatpush2.bf16.msra.mxu0 0
  %70 = vmatprep.subr.bf16.mxu0 0
  %71 = vmatpush2.bf16.msra.mxu0 0
  %72 = vmatprep.subr.bf16.mxu0 0
  %73 = vmatpush2.bf16.msra.mxu0 0
  %74 = vmatprep.subr.bf16.mxu0 0
  %75 = vmatpush2.bf16.msra.mxu0 0
  %76 = vmatprep.subr.bf16.mxu0 0
  %77 = vmatpush2.bf16.msra.mxu0 0
  %78 = vmatprep.subr.bf16.mxu0 0
  %79 = vmatpush2.bf16.msra.mxu0 0
  %80 = vmatprep.subr.bf16.mxu0 0
  %81 = vmatpush2.bf16.msra.mxu0 0
  %82 = vmatprep.mubr.bf16.mxu0 0
  %83 = vmatmul.mubr.bf16.gmra.mxu0 %v48
  %v84 = vpop.f32.mrf.mxu0
  %v85 = vadd.f32 %v26, %v84
  %v86 = vpop.f32.mrf.mxu0
  %v87 = vpop.f32.mrf.mxu0
  %v88 = vpop.f32.mrf.mxu0
  %89 = vdwg.mxu0
  %90 = vst [vmem:[%s3] sm:$0xff] %v85
  // Predicated region
  $region14: #{_lambda_.20} parent=0 // pred_check
    _
  $region15: #{_lambda_.20} parent=0 // pred_check_branch
    %92 = sbr.rel (0) target = $region17
  $region16: #{_lambda_.20} parent=0 // pred_region
    _
  $region17: #{_lambda_.20} parent=0 // pred_fallthru
    _
  // Predicated region
  $region18: #{_lambda_.20} parent=0 // pred_check
    _
  $region19: #{_lambda_.20} parent=0 // pred_check_branch
    %94 = sbr.rel (0) target = $region21
  $region20: #{_lambda_.20} parent=0 // pred_region
    _
  $region21: #{_lambda_.20} parent=0 // pred_fallthru
    _

// kernel: _lambda_.21
$region0: #{_lambda_.21}
  #allocation0 [shape = 'u32[]', space=smem, size = 0x4, offset = 0x4, fixed_abs, tag = 'smem constant byte address 0x4 - core index']
  #allocation1 [shape = 'u32[144,128]{1,0:T(1,128)}', space=vmem, size = 0x12000, scoped, tag = 'internal scratch']
  %s0 = inlined_call_operand.vmem [shape: bf16[80,128], index: 0, kind: input, shape index: {}]
  %s1 = inlined_call_operand.vmem [shape: bf16[16,80], index: 1, kind: input, shape index: {}]
  %s2 = inlined_call_operand.vmem [shape: f32[16,1], index: 2, kind: input, shape index: {}]
  %s3 = inlined_call_operand.vmem [shape: f32[16,128], index: 3, kind: output, shape index: {}]
  %s4 = sld [smem:[#allocation0]]
  $region22: #{_lambda_.21} parent=0
    _
  %s6 = ssub.s32 1, %s4
  %s7 = scalar_select 0, %s6, %s4
  // Predicated region
  $region2: #{_lambda_.21} parent=0 // pred_check
    _
  $region3: #{_lambda_.21} parent=0 // pred_check_branch
    %9 = sbr.rel (0) target = $region5
  $region4: #{_lambda_.21} parent=0 // pred_region
    _
  $region5: #{_lambda_.21} parent=0 // pred_fallthru
    _
  // Predicated region
  $region6: #{_lambda_.21} parent=0 // pred_check
    _
  $region7: #{_lambda_.21} parent=0 // pred_check_branch
    %11 = sbr.rel (0) target = $region9
  $region8: #{_lambda_.21} parent=0 // pred_region
    _
  $region9: #{_lambda_.21} parent=0 // pred_fallthru
    _
  // Predicated region
  $region10: #{_lambda_.21} parent=0 // pred_check
    _
  $region11: #{_lambda_.21} parent=0 // pred_check_branch
    %13 = sbr.rel (0) target = $region13
  $region12: #{_lambda_.21} parent=0 // pred_region
    _
  $region13: #{_lambda_.21} parent=0 // pred_fallthru
    _
  %v15 = vld [vmem:[%s1] sm:$0xf]
  %v16 = vld [vmem:[%s1 + $0x4] sm:$0xf]
  %v17 = vld [vmem:[%s0] sm:$0xf]
  %v18 = vld [vmem:[%s0 + $0x4] sm:$0xf]
  %v19 = vld [vmem:[%s0 + $0x8] sm:$0xf]
  %v20 = vld [vmem:[%s0 + $0xc] sm:$0xf]
  %v21 = vld [vmem:[%s0 + $0x10] sm:$0xf]
  %v22 = vld [vmem:[%s0 + $0x14] sm:$0xf]
  %v23 = vld [vmem:[%s0 + $0x18] sm:$0xf]
  %v24 = vld [vmem:[%s0 + $0x1c] sm:$0xf]
  %v25 = vld [vmem:[%s0 + $0x20] sm:$0xf]
  %v26 = vld [vmem:[%s0 + $0x24] sm:$0xf]
  %v27 = vld [vmem:[%s2] sm:$0xff]
  %v28 = vld [vmem:[%s2 + $0x8] sm:$0xff]
  %30 = vset.pattern.permute.xlu0 0
  %31 = vperm.xlu0 %30, %v27
  %v32 = vpop.permute.xlu0 %31
  %35 = vset.pattern.permute.xlu0 0
  %36 = vperm.xlu0 %35, %v28
  %v37 = vpop.permute.xlu0 %36
  %v41 = vunpack.c.l.b16 %v15
  %v42 = vunpack.c.l.b16 %v16
  %v43 = vpack.c.b16 %v42, %v41
  %v54 = vunpack.c.l.b16 %v17
  %v55 = vunpack.c.l.b16 %v18
  %v56 = vunpack.c.l.b16 %v19
  %v57 = vunpack.c.l.b16 %v20
  %v58 = vunpack.c.l.b16 %v21
  %v59 = vunpack.c.l.b16 %v22
  %v60 = vunpack.c.l.b16 %v23
  %v61 = vunpack.c.l.b16 %v24
  %v62 = vunpack.c.l.b16 %v25
  %v63 = vunpack.c.l.b16 %v26
  %v64 = vpack.c.b16 %v55, %v54
  %v65 = vpack.c.b16 %v57, %v56
  %v66 = vpack.c.b16 %v59, %v58
  %v67 = vpack.c.b16 %v61, %v60
  %v68 = vpack.c.b16 %v63, %v62
  %vm74 = vcmask 654336
  %v76 = vsel %vm74, %v43, 0
  %78 = vmatprep.subr.bf16.mxu0 0
  %79 = vmatpush1.bf16.msra.mxu0 0
  %80 = vmatprep.subr.bf16.mxu0 0
  %81 = vmatpush1.bf16.msra.mxu0 0
  %82 = vmatprep.subr.bf16.mxu0 0
  %83 = vmatpush1.bf16.msra.mxu0 0
  %84 = vmatprep.subr.bf16.mxu0 0
  %85 = vmatpush1.bf16.msra.mxu0 %v68
  %86 = vmatprep.subr.bf16.mxu0 0
  %87 = vmatpush1.bf16.msra.mxu0 %v67
  %88 = vmatprep.subr.bf16.mxu0 0
  %89 = vmatpush1.bf16.msra.mxu0 %v66
  %90 = vmatprep.subr.bf16.mxu0 0
  %91 = vmatpush1.bf16.msra.mxu0 %v65
  %92 = vmatprep.subr.bf16.mxu0 0
  %93 = vmatpush1.bf16.msra.mxu0 %v64
  %94 = vmatprep.subr.bf16.mxu0 0
  %95 = vmatpush2.bf16.msra.mxu0 0
  %96 = vmatprep.subr.bf16.mxu0 0
  %97 = vmatpush2.bf16.msra.mxu0 0
  %98 = vmatprep.subr.bf16.mxu0 0
  %99 = vmatpush2.bf16.msra.mxu0 0
  %100 = vmatprep.subr.bf16.mxu0 0
  %101 = vmatpush2.bf16.msra.mxu0 0
  %102 = vmatprep.subr.bf16.mxu0 0
  %103 = vmatpush2.bf16.msra.mxu0 0
  %104 = vmatprep.subr.bf16.mxu0 0
  %105 = vmatpush2.bf16.msra.mxu0 0
  %106 = vmatprep.subr.bf16.mxu0 0
  %107 = vmatpush2.bf16.msra.mxu0 0
  %108 = vmatprep.subr.bf16.mxu0 0
  %109 = vmatpush2.bf16.msra.mxu0 0
  %110 = vmatprep.mubr.bf16.mxu0 0
  %111 = vmatmul.mubr.bf16.gmra.mxu0 %v76
  %v112 = vpop.f32.mrf.mxu0
  %v113 = vadd.f32 %v32, %v112
  %v114 = vpop.f32.mrf.mxu0
  %v115 = vpop.f32.mrf.mxu0
  %v116 = vadd.f32 %v37, %v115
  %v117 = vpop.f32.mrf.mxu0
  %118 = vdwg.mxu0
  %119 = vst [vmem:[%s3] sm:$0xff] %v113
  %120 = vst [vmem:[%s3 + $0x8] sm:$0xff] %v116
  // Predicated region
  $region14: #{_lambda_.21} parent=0 // pred_check
    _
  $region15: #{_lambda_.21} parent=0 // pred_check_branch
    %122 = sbr.rel (0) target = $region17
  $region16: #{_lambda_.21} parent=0 // pred_region
    _
  $region17: #{_lambda_.21} parent=0 // pred_fallthru
    _
  // Predicated region
  $region18: #{_lambda_.21} parent=0 // pred_check
    _
  $region19: #{_lambda_.21} parent=0 // pred_check_branch
    %124 = sbr.rel (0) target = $region21
  $region20: #{_lambda_.21} parent=0 // pred_region
    _
  $region21: #{_lambda_.21} parent=0 // pred_fallthru
    _

// kernel: _lambda_.22
$region0: #{_lambda_.22}
  #allocation0 [shape = 'u32[]', space=smem, size = 0x4, offset = 0x4, fixed_abs, tag = 'smem constant byte address 0x4 - core index']
  #allocation1 [shape = 'u32[144,128]{1,0:T(1,128)}', space=vmem, size = 0x12000, scoped, tag = 'internal scratch']
  %s0 = inlined_call_operand.vmem [shape: bf16[144,128], index: 0, kind: input, shape index: {}]
  %s1 = inlined_call_operand.vmem [shape: bf16[32,144], index: 1, kind: input, shape index: {}]
  %s2 = inlined_call_operand.vmem [shape: f32[32,1], index: 2, kind: input, shape index: {}]
  %s3 = inlined_call_operand.vmem [shape: f32[32,128], index: 3, kind: output, shape index: {}]
  %s4 = sld [smem:[#allocation0]]
  $region22: #{_lambda_.22} parent=0
    _
  %s6 = ssub.s32 1, %s4
  %s7 = scalar_select 0, %s6, %s4
  // Predicated region
  $region2: #{_lambda_.22} parent=0 // pred_check
    _
  $region3: #{_lambda_.22} parent=0 // pred_check_branch
    %9 = sbr.rel (0) target = $region5
  $region4: #{_lambda_.22} parent=0 // pred_region
    _
  $region5: #{_lambda_.22} parent=0 // pred_fallthru
    _
  // Predicated region
  $region6: #{_lambda_.22} parent=0 // pred_check
    _
  $region7: #{_lambda_.22} parent=0 // pred_check_branch
    %11 = sbr.rel (0) target = $region9
  $region8: #{_lambda_.22} parent=0 // pred_region
    _
  $region9: #{_lambda_.22} parent=0 // pred_fallthru
    _
  // Predicated region
  $region10: #{_lambda_.22} parent=0 // pred_check
    _
  $region11: #{_lambda_.22} parent=0 // pred_check_branch
    %13 = sbr.rel (0) target = $region13
  $region12: #{_lambda_.22} parent=0 // pred_region
    _
  $region13: #{_lambda_.22} parent=0 // pred_fallthru
    _
  %v15 = vld [vmem:[%s1] sm:$0xff]
  %v16 = vld [vmem:[%s1 + $0x8] sm:$0xff]
  %v17 = vld [vmem:[%s1 + $0x10] sm:$0xff]
  %v18 = vld [vmem:[%s1 + $0x18] sm:$0xff]
  %v19 = vld [vmem:[%s0] sm:$0xf]
  %v20 = vld [vmem:[%s0 + $0x4] sm:$0xf]
  %v21 = vld [vmem:[%s0 + $0x8] sm:$0xf]
  %v22 = vld [vmem:[%s0 + $0xc] sm:$0xf]
  %v23 = vld [vmem:[%s0 + $0x10] sm:$0xf]
  %v24 = vld [vmem:[%s0 + $0x14] sm:$0xf]
  %v25 = vld [vmem:[%s0 + $0x18] sm:$0xf]
  %v26 = vld [vmem:[%s0 + $0x1c] sm:$0xf]
  %v27 = vld [vmem:[%s0 + $0x20] sm:$0xf]
  %v28 = vld [vmem:[%s0 + $0x24] sm:$0xf]
  %v29 = vld [vmem:[%s0 + $0x28] sm:$0xf]
  %v30 = vld [vmem:[%s0 + $0x2c] sm:$0xf]
  %v31 = vld [vmem:[%s0 + $0x30] sm:$0xf]
  %v32 = vld [vmem:[%s0 + $0x34] sm:$0xf]
  %v33 = vld [vmem:[%s0 + $0x38] sm:$0xf]
  %v34 = vld [vmem:[%s0 + $0x3c] sm:$0xf]
  %v35 = vld [vmem:[%s0 + $0x40] sm:$0xf]
  %v36 = vld [vmem:[%s0 + $0x44] sm:$0xf]
  %v37 = vld [vmem:[%s2] sm:$0xff]
  %v38 = vld [vmem:[%s2 + $0x8] sm:$0xff]
  %v39 = vld [vmem:[%s2 + $0x10] sm:$0xff]
  %v40 = vld [vmem:[%s2 + $0x18] sm:$0xff]
  %42 = vset.pattern.permute.xlu0 0
  %43 = vperm.xlu0 %42, %v37
  %v44 = vpop.permute.xlu0 %43
  %47 = vset.pattern.permute.xlu0 0
  %48 = vperm.xlu0 %47, %v38
  %v49 = vpop.permute.xlu0 %48
  %52 = vset.pattern.permute.xlu0 0
  %53 = vperm.xlu0 %52, %v39
  %v54 = vpop.permute.xlu0 %53
  %57 = vset.pattern.permute.xlu0 0
  %58 = vperm.xlu0 %57, %v40
  %v59 = vpop.permute.xlu0 %58
  %v65 = vunpack.c.l.b16 %v15
  %v66 = vunpack.c.h.b16 %v15
  %v67 = vunpack.c.l.b16 %v16
  %v68 = vunpack.c.h.b16 %v16
  %v69 = vunpack.c.l.b16 %v17
  %v70 = vunpack.c.h.b16 %v17
  %v71 = vunpack.c.l.b16 %v18
  %v72 = vunpack.c.h.b16 %v18
  %v73 = vpack.c.b16 %v67, %v65
  %v74 = vpack.c.b16 %v68, %v66
  %v75 = vpack.c.b16 %v71, %v69
  %v76 = vpack.c.b16 %v72, %v70
  %v97 = vunpack.c.l.b16 %v19
  %v98 = vunpack.c.l.b16 %v20
  %v99 = vunpack.c.l.b16 %v21
  %v100 = vunpack.c.l.b16 %v22
  %v101 = vunpack.c.l.b16 %v23
  %v102 = vunpack.c.l.b16 %v24
  %v103 = vunpack.c.l.b16 %v25
  %v104 = vunpack.c.l.b16 %v26
  %v105 = vunpack.c.l.b16 %v27
  %v106 = vunpack.c.l.b16 %v28
  %v107 = vunpack.c.l.b16 %v29
  %v108 = vunpack.c.l.b16 %v30
  %v109 = vunpack.c.l.b16 %v31
  %v110 = vunpack.c.l.b16 %v32
  %v111 = vunpack.c.l.b16 %v33
  %v112 = vunpack.c.l.b16 %v34
  %v113 = vunpack.c.l.b16 %v35
  %v114 = vunpack.c.l.b16 %v36
  %v115 = vpack.c.b16 %v98, %v97
  %v116 = vpack.c.b16 %v100, %v99
  %v117 = vpack.c.b16 %v102, %v101
  %v118 = vpack.c.b16 %v104, %v103
  %v119 = vpack.c.b16 %v106, %v105
  %v120 = vpack.c.b16 %v108, %v107
  %v121 = vpack.c.b16 %v110, %v109
  %v122 = vpack.c.b16 %v112, %v111
  %v123 = vpack.c.b16 %v114, %v113
  %vm133 = vcmask 130048
  %v135 = vsel %vm133, %v74, 0
  %v138 = vsel %vm133, %v76, 0
  %140 = vmatprep.subr.bf16.mxu0 0
  %141 = vmatpush1.bf16.msra.mxu0 %v122
  %142 = vmatprep.subr.bf16.mxu0 0
  %143 = vmatpush1.bf16.msra.mxu0 %v121
  %144 = vmatprep.subr.bf16.mxu0 0
  %145 = vmatpush1.bf16.msra.mxu0 %v120
  %146 = vmatprep.subr.bf16.mxu0 0
  %147 = vmatpush1.bf16.msra.mxu0 %v119
  %148 = vmatprep.subr.bf16.mxu0 0
  %149 = vmatpush1.bf16.msra.mxu0 %v118
  %150 = vmatprep.subr.bf16.mxu0 0
  %151 = vmatpush1.bf16.msra.mxu0 %v117
  %152 = vmatprep.subr.bf16.mxu0 0
  %153 = vmatpush1.bf16.msra.mxu0 %v116
  %154 = vmatprep.subr.bf16.mxu0 0
  %155 = vmatpush1.bf16.msra.mxu0 %v115
  %156 = vmatprep.subr.bf16.mxu0 0
  %157 = vmatpush2.bf16.msra.mxu0 0
  %158 = vmatprep.subr.bf16.mxu0 0
  %159 = vmatpush2.bf16.msra.mxu0 0
  %160 = vmatprep.subr.bf16.mxu0 0
  %161 = vmatpush2.bf16.msra.mxu0 0
  %162 = vmatprep.subr.bf16.mxu0 0
  %163 = vmatpush2.bf16.msra.mxu0 0
  %164 = vmatprep.subr.bf16.mxu0 0
  %165 = vmatpush2.bf16.msra.mxu0 0
  %166 = vmatprep.subr.bf16.mxu0 0
  %167 = vmatpush2.bf16.msra.mxu0 0
  %168 = vmatprep.subr.bf16.mxu0 0
  %169 = vmatpush2.bf16.msra.mxu0 0
  %170 = vmatprep.subr.bf16.mxu0 0
  %171 = vmatpush2.bf16.msra.mxu0 %v123
  %172 = vmatprep.mubr.bf16.mxu0 %v135
  %173 = vmatmul.mubr.bf16.gmra.mxu0 %v73
  %v174 = vpop.f32.mrf.mxu0
  %v175 = vadd.f32 %v44, %v174
  %v176 = vpop.f32.mrf.mxu0
  %v177 = vpop.f32.mrf.mxu0
  %v178 = vadd.f32 %v49, %v177
  %v179 = vpop.f32.mrf.mxu0
  %180 = vmatprep.mubr.bf16.mxu0 %v138
  %181 = vmatmul.mubr.bf16.gmra.mxu0 %v75
  %v182 = vpop.f32.mrf.mxu0
  %v183 = vadd.f32 %v54, %v182
  %v184 = vpop.f32.mrf.mxu0
  %v185 = vpop.f32.mrf.mxu0
  %v186 = vadd.f32 %v59, %v185
  %v187 = vpop.f32.mrf.mxu0
  %188 = vdwg.mxu0
  %189 = vst [vmem:[%s3] sm:$0xff] %v175
  %190 = vst [vmem:[%s3 + $0x8] sm:$0xff] %v178
  %191 = vst [vmem:[%s3 + $0x10] sm:$0xff] %v183
  %192 = vst [vmem:[%s3 + $0x18] sm:$0xff] %v186
  // Predicated region
  $region14: #{_lambda_.22} parent=0 // pred_check
    _
  $region15: #{_lambda_.22} parent=0 // pred_check_branch
    %194 = sbr.rel (0) target = $region17
  $region16: #{_lambda_.22} parent=0 // pred_region
    _
  $region17: #{_lambda_.22} parent=0 // pred_fallthru
    _
  // Predicated region
  $region18: #{_lambda_.22} parent=0 // pred_check
    _
  $region19: #{_lambda_.22} parent=0 // pred_check_branch
    %196 = sbr.rel (0) target = $region21
  $region20: #{_lambda_.22} parent=0 // pred_region
    _
  $region21: #{_lambda_.22} parent=0 // pred_fallthru
    _

// kernel: _lambda_.23
$region0: #{_lambda_.23}
  #allocation0 [shape = 'u32[]', space=smem, size = 0x4, offset = 0x4, fixed_abs, tag = 'smem constant byte address 0x4 - core index']
  #allocation1 [shape = 'u32[144,128]{1,0:T(1,128)}', space=vmem, size = 0x12000, scoped, tag = 'internal scratch']
  #allocation2 [shape = 'f32[1,1]{1,0:T(1,128)S(1)}', space=vmem, size = 0x200, scoped, tag = 'scoped memory for _lambda_.23']
  %s0 = inlined_call_operand.vmem [shape: bf16[288,128], index: 0, kind: input, shape index: {}]
  %s1 = inlined_call_operand.vmem [shape: bf16[1,288], index: 1, kind: input, shape index: {}]
  %s2 = inlined_call_operand.<no memory space> [shape: f32[1,1], index: 2, kind: input, shape index: {}]
  %s3 = inlined_call_operand.vmem [shape: f32[1,128], index: 3, kind: output, shape index: {}]
  %s4 = sld [smem:[#allocation0]]
  $region22: #{_lambda_.23} parent=0
    _
  %s6 = ssub.s32 1, %s4
  %s7 = scalar_select 0, %s6, %s4
  %v8 = vstv %s2
  %9 = vst [vmem:[#allocation2] sm:$0x1] %v8
  // Predicated region
  $region2: #{_lambda_.23} parent=0 // pred_check
    _
  $region3: #{_lambda_.23} parent=0 // pred_check_branch
    %11 = sbr.rel (0) target = $region5
  $region4: #{_lambda_.23} parent=0 // pred_region
    _
  $region5: #{_lambda_.23} parent=0 // pred_fallthru
    _
  // Predicated region
  $region6: #{_lambda_.23} parent=0 // pred_check
    _
  $region7: #{_lambda_.23} parent=0 // pred_check_branch
    %13 = sbr.rel (0) target = $region9
  $region8: #{_lambda_.23} parent=0 // pred_region
    _
  $region9: #{_lambda_.23} parent=0 // pred_fallthru
    _
  // Predicated region
  $region10: #{_lambda_.23} parent=0 // pred_check
    _
  $region11: #{_lambda_.23} parent=0 // pred_check_branch
    %15 = sbr.rel (0) target = $region13
  $region12: #{_lambda_.23} parent=0 // pred_region
    _
  $region13: #{_lambda_.23} parent=0 // pred_fallthru
    _
  %v17 = vld [vmem:[%s1] sm:$0x7]
  %v18 = vld [vmem:[%s0] sm:$0xf]
  %v19 = vld [vmem:[%s0 + $0x4] sm:$0xf]
  %v20 = vld [vmem:[%s0 + $0x8] sm:$0xf]
  %v21 = vld [vmem:[%s0 + $0xc] sm:$0xf]
  %v22 = vld [vmem:[%s0 + $0x10] sm:$0xf]
  %v23 = vld [vmem:[%s0 + $0x14] sm:$0xf]
  %v24 = vld [vmem:[%s0 + $0x18] sm:$0xf]
  %v25 = vld [vmem:[%s0 + $0x1c] sm:$0xf]
  %v26 = vld [vmem:[%s0 + $0x20] sm:$0xf]
  %v27 = vld [vmem:[%s0 + $0x24] sm:$0xf]
  %v28 = vld [vmem:[%s0 + $0x28] sm:$0xf]
  %v29 = vld [vmem:[%s0 + $0x2c] sm:$0xf]
  %v30 = vld [vmem:[%s0 + $0x30] sm:$0xf]
  %v31 = vld [vmem:[%s0 + $0x34] sm:$0xf]
  %v32 = vld [vmem:[%s0 + $0x38] sm:$0xf]
  %v33 = vld [vmem:[%s0 + $0x3c] sm:$0xf]
  %v34 = vld [vmem:[%s0 + $0x40] sm:$0xf]
  %v35 = vld [vmem:[%s0 + $0x44] sm:$0xf]
  %v36 = vld [vmem:[%s0 + $0x48] sm:$0xf]
  %v37 = vld [vmem:[%s0 + $0x4c] sm:$0xf]
  %v38 = vld [vmem:[%s0 + $0x50] sm:$0xf]
  %v39 = vld [vmem:[%s0 + $0x54] sm:$0xf]
  %v40 = vld [vmem:[%s0 + $0x58] sm:$0xf]
  %v41 = vld [vmem:[%s0 + $0x5c] sm:$0xf]
  %v42 = vld [vmem:[%s0 + $0x60] sm:$0xf]
  %v43 = vld [vmem:[%s0 + $0x64] sm:$0xf]
  %v44 = vld [vmem:[%s0 + $0x68] sm:$0xf]
  %v45 = vld [vmem:[%s0 + $0x6c] sm:$0xf]
  %v46 = vld [vmem:[%s0 + $0x70] sm:$0xf]
  %v47 = vld [vmem:[%s0 + $0x74] sm:$0xf]
  %v48 = vld [vmem:[%s0 + $0x78] sm:$0xf]
  %v49 = vld [vmem:[%s0 + $0x7c] sm:$0xf]
  %v50 = vld [vmem:[%s0 + $0x80] sm:$0xf]
  %v51 = vld [vmem:[%s0 + $0x84] sm:$0xf]
  %v52 = vld [vmem:[%s0 + $0x88] sm:$0xf]
  %v53 = vld [vmem:[%s0 + $0x8c] sm:$0xf]
  %v54 = vld [vmem:[#allocation2] sm:$0x1]
  %56 = vset.pattern.permute.xlu0 0
  %57 = vperm.xlu0 %56, %v54
  %v58 = vpop.permute.xlu0 %57
  %v60 = vlaneseq
  %v61 = vshrl.u32 %v60, 7
  %v62 = vsub.s32 0, %v61
  %v63 = vrot.slane %v58, %v62
  %v66 = vunpack.c.l.s4 1966171168
  %v67 = vunpack.c.0.s8 %v66
  %v68 = vlaneseq
  %v69 = vshrl.u32 %v68, 7
  %v70 = vsub.s32 %v67, %v69
  %v71 = vrot.slane %v17, %v70
  %v72 = vcombine.high %v71, %v71
  %v74 = vunpack.c.l.s4 1966171168
  %v75 = vunpack.c.0.s8 %v74
  %v76 = vlaneseq
  %v77 = vshrl.u32 %v76, 7
  %v78 = vsub.s32 %v75, %v77
  %v79 = vrot.slane %v71, %v78
  %v81 = vunpack.c.l.s4 1966171168
  %v82 = vunpack.c.0.s8 %v81
  %v83 = vlaneseq
  %v84 = vshrl.u32 %v83, 7
  %v85 = vsub.s32 %v82, %v84
  %v86 = vrot.slane %v72, %v85
  %v87 = vcombine.high %v79, %v79
  %v126 = vunpack.c.l.b16 %v18
  %v127 = vunpack.c.l.b16 %v19
  %v128 = vunpack.c.l.b16 %v20
  %v129 = vunpack.c.l.b16 %v21
  %v130 = vunpack.c.l.b16 %v22
  %v131 = vunpack.c.l.b16 %v23
  %v132 = vunpack.c.l.b16 %v24
  %v133 = vunpack.c.l.b16 %v25
  %v134 = vunpack.c.l.b16 %v26
  %v135 = vunpack.c.l.b16 %v27
  %v136 = vunpack.c.l.b16 %v28
  %v137 = vunpack.c.l.b16 %v29
  %v138 = vunpack.c.l.b16 %v30
  %v139 = vunpack.c.l.b16 %v31
  %v140 = vunpack.c.l.b16 %v32
  %v141 = vunpack.c.l.b16 %v33
  %v142 = vunpack.c.l.b16 %v34
  %v143 = vunpack.c.l.b16 %v35
  %v144 = vunpack.c.l.b16 %v36
  %v145 = vunpack.c.l.b16 %v37
  %v146 = vunpack.c.l.b16 %v38
  %v147 = vunpack.c.l.b16 %v39
  %v148 = vunpack.c.l.b16 %v40
  %v149 = vunpack.c.l.b16 %v41
  %v150 = vunpack.c.l.b16 %v42
  %v151 = vunpack.c.l.b16 %v43
  %v152 = vunpack.c.l.b16 %v44
  %v153 = vunpack.c.l.b16 %v45
  %v154 = vunpack.c.l.b16 %v46
  %v155 = vunpack.c.l.b16 %v47
  %v156 = vunpack.c.l.b16 %v48
  %v157 = vunpack.c.l.b16 %v49
  %v158 = vunpack.c.l.b16 %v50
  %v159 = vunpack.c.l.b16 %v51
  %v160 = vunpack.c.l.b16 %v52
  %v161 = vunpack.c.l.b16 %v53
  %v162 = vpack.c.b16 %v127, %v126
  %v163 = vpack.c.b16 %v129, %v128
  %v164 = vpack.c.b16 %v131, %v130
  %v165 = vpack.c.b16 %v133, %v132
  %v166 = vpack.c.b16 %v135, %v134
  %v167 = vpack.c.b16 %v137, %v136
  %v168 = vpack.c.b16 %v139, %v138
  %v169 = vpack.c.b16 %v141, %v140
  %v170 = vpack.c.b16 %v143, %v142
  %v171 = vpack.c.b16 %v145, %v144
  %v172 = vpack.c.b16 %v147, %v146
  %v173 = vpack.c.b16 %v149, %v148
  %v174 = vpack.c.b16 %v151, %v150
  %v175 = vpack.c.b16 %v153, %v152
  %v176 = vpack.c.b16 %v155, %v154
  %v177 = vpack.c.b16 %v157, %v156
  %v178 = vpack.c.b16 %v159, %v158
  %v179 = vpack.c.b16 %v161, %v160
  %vm198 = vcmask 261120
  %v200 = vsel %vm198, %v87, 0
  %202 = vmatprep.subr.bf16.mxu0 0
  %203 = vmatpush1.bf16.msra.mxu0 %v169
  %204 = vmatprep.subr.bf16.mxu0 0
  %205 = vmatpush1.bf16.msra.mxu0 %v168
  %206 = vmatprep.subr.bf16.mxu0 0
  %207 = vmatpush1.bf16.msra.mxu0 %v167
  %208 = vmatprep.subr.bf16.mxu0 0
  %209 = vmatpush1.bf16.msra.mxu0 %v166
  %210 = vmatprep.subr.bf16.mxu0 0
  %211 = vmatpush1.bf16.msra.mxu0 %v165
  %212 = vmatprep.subr.bf16.mxu0 0
  %213 = vmatpush1.bf16.msra.mxu0 %v164
  %214 = vmatprep.subr.bf16.mxu0 0
  %215 = vmatpush1.bf16.msra.mxu0 %v163
  %216 = vmatprep.subr.bf16.mxu0 0
  %217 = vmatpush1.bf16.msra.mxu0 %v162
  %218 = vmatprep.subr.bf16.mxu0 0
  %219 = vmatpush2.bf16.msra.mxu0 %v177
  %220 = vmatprep.subr.bf16.mxu0 0
  %221 = vmatpush2.bf16.msra.mxu0 %v176
  %222 = vmatprep.subr.bf16.mxu0 0
  %223 = vmatpush2.bf16.msra.mxu0 %v175
  %224 = vmatprep.subr.bf16.mxu0 0
  %225 = vmatpush2.bf16.msra.mxu0 %v174
  %226 = vmatprep.subr.bf16.mxu0 0
  %227 = vmatpush2.bf16.msra.mxu0 %v173
  %228 = vmatprep.subr.bf16.mxu0 0
  %229 = vmatpush2.bf16.msra.mxu0 %v172
  %230 = vmatprep.subr.bf16.mxu0 0
  %231 = vmatpush2.bf16.msra.mxu0 %v171
  %232 = vmatprep.subr.bf16.mxu0 0
  %233 = vmatpush2.bf16.msra.mxu0 %v170
  %234 = vmatprep.mubr.bf16.mxu0 %v86
  %235 = vmatmul.mubr.bf16.gmra.mxu0 %v79
  %v236 = vpop.f32.mrf.mxu0
  %v237 = vadd.f32 %v63, %v236
  %v238 = vpop.f32.mrf.mxu0
  %v239 = vpop.f32.mrf.mxu0
  %v240 = vpop.f32.mrf.mxu0
  %241 = vdwg.mxu0
  %242 = vmatprep.subr.bf16.mxu0 0
  %243 = vmatpush1.bf16.msra.mxu0 0
  %244 = vmatprep.subr.bf16.mxu0 0
  %245 = vmatpush1.bf16.msra.mxu0 0
  %246 = vmatprep.subr.bf16.mxu0 0
  %247 = vmatpush1.bf16.msra.mxu0 0
  %248 = vmatprep.subr.bf16.mxu0 0
  %249 = vmatpush1.bf16.msra.mxu0 0
  %250 = vmatprep.subr.bf16.mxu0 0
  %251 = vmatpush1.bf16.msra.mxu0 0
  %252 = vmatprep.subr.bf16.mxu0 0
  %253 = vmatpush1.bf16.msra.mxu0 0
  %254 = vmatprep.subr.bf16.mxu0 0
  %255 = vmatpush1.bf16.msra.mxu0 %v179
  %256 = vmatprep.subr.bf16.mxu0 0
  %257 = vmatpush1.bf16.msra.mxu0 %v178
  %258 = vmatprep.subr.bf16.mxu0 0
  %259 = vmatpush2.bf16.msra.mxu0 0
  %260 = vmatprep.subr.bf16.mxu0 0
  %261 = vmatpush2.bf16.msra.mxu0 0
  %262 = vmatprep.subr.bf16.mxu0 0
  %263 = vmatpush2.bf16.msra.mxu0 0
  %264 = vmatprep.subr.bf16.mxu0 0
  %265 = vmatpush2.bf16.msra.mxu0 0
  %266 = vmatprep.subr.bf16.mxu0 0
  %267 = vmatpush2.bf16.msra.mxu0 0
  %268 = vmatprep.subr.bf16.mxu0 0
  %269 = vmatpush2.bf16.msra.mxu0 0
  %270 = vmatprep.subr.bf16.mxu0 0
  %271 = vmatpush2.bf16.msra.mxu0 0
  %272 = vmatprep.subr.bf16.mxu0 0
  %273 = vmatpush2.bf16.msra.mxu0 0
  %274 = vmatprep.mubr.bf16.mxu0 0
  %275 = vmatmul.mubr.bf16.gmra.mxu0 %v200
  %v276 = vpop.f32.mrf.mxu0
  %v277 = vadd.f32 %v237, %v276
  %v278 = vpop.f32.mrf.mxu0
  %v279 = vpop.f32.mrf.mxu0
  %v280 = vpop.f32.mrf.mxu0
  %281 = vdwg.mxu0
  %282 = vst [vmem:[%s3] sm:$0x1] %v277
  // Predicated region
  $region14: #{_lambda_.23} parent=0 // pred_check
    _
  $region15: #{_lambda_.23} parent=0 // pred_check_branch
    %284 = sbr.rel (0) target = $region17
  $region16: #{_lambda_.23} parent=0 // pred_region
    _
  $region17: #{_lambda_.23} parent=0 // pred_fallthru
    _
  // Predicated region
  $region18: #{_lambda_.23} parent=0 // pred_check
    _
  $region19: #{_lambda_.23} parent=0 // pred_check_branch
    %286 = sbr.rel (0) target = $region21
  $region20: #{_lambda_.23} parent=0 // pred_region
    _
  $region21: #{_lambda_.23} parent=0 // pred_fallthru
    _

// kernel: _lambda_.24
$region0: #{_lambda_.24}
  #allocation0 [shape = 'u32[]', space=smem, size = 0x4, offset = 0x4, fixed_abs, tag = 'smem constant byte address 0x4 - core index']
  #allocation1 [shape = 'u32[144,128]{1,0:T(1,128)}', space=vmem, size = 0x12000, scoped, tag = 'internal scratch']
  %s0 = inlined_call_operand.vmem [shape: f32[40,64], index: 0, kind: input, shape index: {}]
  %s1 = inlined_call_operand.vmem [shape: f32[64,256], index: 1, kind: input, shape index: {}]
  %s2 = inlined_call_operand.vmem [shape: f32[40,128], index: 2, kind: output, shape index: {}]
  %s3 = sld [smem:[#allocation0]]
  $region18: #{_lambda_.24} parent=0
    _
  %s5 = ssub.s32 1, %s3
  %s6 = scalar_select 0, %s5, %s3
  // Predicated region
  $region2: #{_lambda_.24} parent=0 // pred_check
    _
  $region3: #{_lambda_.24} parent=0 // pred_check_branch
    %8 = sbr.rel (0) target = $region5
  $region4: #{_lambda_.24} parent=0 // pred_region
    _
  $region5: #{_lambda_.24} parent=0 // pred_fallthru
    _
  // Predicated region
  $region6: #{_lambda_.24} parent=0 // pred_check
    _
  $region7: #{_lambda_.24} parent=0 // pred_check_branch
    %10 = sbr.rel (0) target = $region9
  $region8: #{_lambda_.24} parent=0 // pred_region
    _
  $region9: #{_lambda_.24} parent=0 // pred_fallthru
    _
  %v11 = vld [vmem:[%s0] sm:$0xff]
  %v12 = vld [vmem:[%s0 + $0x8] sm:$0xff]
  %v13 = vld [vmem:[%s0 + $0x10] sm:$0xff]
  %v14 = vld [vmem:[%s0 + $0x18] sm:$0xff]
  %v15 = vld [vmem:[%s0 + $0x20] sm:$0xff]
  %v16 = vld [vmem:[%s1] sm:$0xff]
  %v17 = vld [vmem:[%s1 + $0x8] sm:$0xff]
  %v18 = vld [vmem:[%s1 + $0x10] sm:$0xff]
  %v19 = vld [vmem:[%s1 + $0x18] sm:$0xff]
  %v20 = vld [vmem:[%s1 + $0x20] sm:$0xff]
  %v21 = vld [vmem:[%s1 + $0x28] sm:$0xff]
  %v22 = vld [vmem:[%s1 + $0x30] sm:$0xff]
  %v23 = vld [vmem:[%s1 + $0x38] sm:$0xff]
  %v24 = vld [vmem:[%s1 + $0x40] sm:$0xff]
  %v25 = vld [vmem:[%s1 + $0x48] sm:$0xff]
  %v26 = vld [vmem:[%s1 + $0x50] sm:$0xff]
  %v27 = vld [vmem:[%s1 + $0x58] sm:$0xff]
  %v28 = vld [vmem:[%s1 + $0x60] sm:$0xff]
  %v29 = vld [vmem:[%s1 + $0x68] sm:$0xff]
  %v30 = vld [vmem:[%s1 + $0x70] sm:$0xff]
  %v31 = vld [vmem:[%s1 + $0x78] sm:$0xff]
  %vm32 = vcmask 523264
  %v34 = vsel %vm32, %v11, 0
  %v37 = vsel %vm32, %v12, 0
  %v40 = vsel %vm32, %v13, 0
  %v43 = vsel %vm32, %v14, 0
  %v46 = vsel %vm32, %v15, 0
  %48 = vmatprep.subr.mxu0 0.0
  %49 = vmatpush1.msra.mxu0 0.0
  %50 = vmatprep.subr.mxu0 0.0
  %51 = vmatpush1.msra.mxu0 0.0
  %52 = vmatprep.subr.mxu0 0.0
  %53 = vmatpush1.msra.mxu0 0.0
  %54 = vmatprep.subr.mxu0 0.0
  %55 = vmatpush1.msra.mxu0 0.0
  %56 = vmatprep.subr.mxu0 0.0
  %57 = vmatpush1.msra.mxu0 0.0
  %58 = vmatprep.subr.mxu0 0.0
  %59 = vmatpush1.msra.mxu0 0.0
  %60 = vmatprep.subr.mxu0 0.0
  %61 = vmatpush1.msra.mxu0 0.0
  %62 = vmatprep.subr.mxu0 0.0
  %63 = vmatpush1.msra.mxu0 0.0
  %64 = vmatprep.subr.mxu0 %v31
  %65 = vmatpush1.msra.mxu0 %v30
  %66 = vmatprep.subr.mxu0 %v29
  %67 = vmatpush1.msra.mxu0 %v28
  %68 = vmatprep.subr.mxu0 %v27
  %69 = vmatpush1.msra.mxu0 %v26
  %70 = vmatprep.subr.mxu0 %v25
  %71 = vmatpush1.msra.mxu0 %v24
  %72 = vmatprep.subr.mxu0 %v23
  %73 = vmatpush1.msra.mxu0 %v22
  %74 = vmatprep.subr.mxu0 %v21
  %75 = vmatpush1.msra.mxu0 %v20
  %76 = vmatprep.subr.mxu0 %v19
  %77 = vmatpush1.msra.mxu0 %v18
  %78 = vmatprep.subr.mxu0 %v17
  %79 = vmatpush1.msra.mxu0 %v16
  %80 = vmatprep.subr.mxu0 0.0
  %81 = vmatpush2.msra.mxu0 0.0
  %82 = vmatprep.subr.mxu0 0.0
  %83 = vmatpush2.msra.mxu0 0.0
  %84 = vmatprep.subr.mxu0 0.0
  %85 = vmatpush2.msra.mxu0 0.0
  %86 = vmatprep.subr.mxu0 0.0
  %87 = vmatpush2.msra.mxu0 0.0
  %88 = vmatprep.subr.mxu0 0.0
  %89 = vmatpush2.msra.mxu0 0.0
  %90 = vmatprep.subr.mxu0 0.0
  %91 = vmatpush2.msra.mxu0 0.0
  %92 = vmatprep.subr.mxu0 0.0
  %93 = vmatpush2.msra.mxu0 0.0
  %94 = vmatprep.subr.mxu0 0.0
  %95 = vmatpush2.msra.mxu0 0.0
  %96 = vmatprep.subr.mxu0 0.0
  %97 = vmatpush2.msra.mxu0 0.0
  %98 = vmatprep.subr.mxu0 0.0
  %99 = vmatpush2.msra.mxu0 0.0
  %100 = vmatprep.subr.mxu0 0.0
  %101 = vmatpush2.msra.mxu0 0.0
  %102 = vmatprep.subr.mxu0 0.0
  %103 = vmatpush2.msra.mxu0 0.0
  %104 = vmatprep.subr.mxu0 0.0
  %105 = vmatpush2.msra.mxu0 0.0
  %106 = vmatprep.subr.mxu0 0.0
  %107 = vmatpush2.msra.mxu0 0.0
  %108 = vmatprep.subr.mxu0 0.0
  %109 = vmatpush2.msra.mxu0 0.0
  %110 = vmatprep.subr.mxu0 0.0
  %111 = vmatpush2.msra.mxu0 0.0
  %112 = vmatprep.mubr.f32.mxu0 0.0
  %113 = vmatmul.mubr.f32.gmra.mxu0 %v34
  %v114 = vpop.f32.mrf.mxu0
  %v115 = vadd.f32 0.0, %v114
  %v116 = vpop.f32.mrf.mxu0
  %v117 = vadd.f32 0.0, %v116
  %118 = vmatprep.mubr.f32.mxu0 0.0
  %119 = vmatmul.mubr.f32.gmra.mxu0 %v37
  %v120 = vpop.f32.mrf.mxu0
  %v121 = vadd.f32 0.0, %v120
  %v122 = vpop.f32.mrf.mxu0
  %v123 = vadd.f32 0.0, %v122
  %124 = vmatprep.mubr.f32.mxu0 0.0
  %125 = vmatmul.mubr.f32.gmra.mxu0 %v40
  %v126 = vpop.f32.mrf.mxu0
  %v127 = vadd.f32 0.0, %v126
  %v128 = vpop.f32.mrf.mxu0
  %v129 = vadd.f32 0.0, %v128
  %130 = vmatprep.mubr.f32.mxu0 0.0
  %131 = vmatmul.mubr.f32.gmra.mxu0 %v43
  %v132 = vpop.f32.mrf.mxu0
  %v133 = vadd.f32 0.0, %v132
  %v134 = vpop.f32.mrf.mxu0
  %v135 = vadd.f32 0.0, %v134
  %136 = vmatprep.mubr.f32.mxu0 0.0
  %137 = vmatmul.mubr.f32.gmra.mxu0 %v46
  %v138 = vpop.f32.mrf.mxu0
  %v139 = vadd.f32 0.0, %v138
  %v140 = vpop.f32.mrf.mxu0
  %v141 = vadd.f32 0.0, %v140
  %142 = vdwg.mxu0
  %v143 = vmul.f32 %v115, %v115
  %v144 = vmul.f32 %v121, %v121
  %v145 = vmul.f32 %v127, %v127
  %v146 = vmul.f32 %v133, %v133
  %v147 = vmul.f32 %v139, %v139
  %v148 = vmul.f32 %v117, %v117
  %v149 = vmul.f32 %v123, %v123
  %v150 = vmul.f32 %v129, %v129
  %v151 = vmul.f32 %v135, %v135
  %v152 = vmul.f32 %v141, %v141
  %v153 = vadd.f32 %v143, %v148
  %v154 = vadd.f32 %v144, %v149
  %v155 = vadd.f32 %v145, %v150
  %v156 = vadd.f32 %v146, %v151
  %v157 = vadd.f32 %v147, %v152
  %v158 = vmax.f32 %v153, 1e-07
  %v159 = vmax.f32 %v154, 1e-07
  %v160 = vmax.f32 %v155, 1e-07
  %v161 = vmax.f32 %v156, 1e-07
  %v162 = vmax.f32 %v157, 1e-07
  %v163 = vrsqrt.pop %v158
  %v164 = vmul.f32 %v158, %v163
  %vm165 = vcmp.eq.f32.partialorder %v158, inf
  %v166 = vsel %vm165, %v158, %v164
  %vm167 = vcmp.eq.f32.partialorder %v158, 0.0
  %v168 = vand.u32 %v158, 2147483648
  %v169 = vsel %vm167, %v168, %v166
  %v170 = vrsqrt.pop %v159
  %v171 = vmul.f32 %v159, %v170
  %vm172 = vcmp.eq.f32.partialorder %v159, inf
  %v173 = vsel %vm172, %v159, %v171
  %vm174 = vcmp.eq.f32.partialorder %v159, 0.0
  %v175 = vand.u32 %v159, 2147483648
  %v176 = vsel %vm174, %v175, %v173
  %v177 = vrsqrt.pop %v160
  %v178 = vmul.f32 %v160, %v177
  %vm179 = vcmp.eq.f32.partialorder %v160, inf
  %v180 = vsel %vm179, %v160, %v178
  %vm181 = vcmp.eq.f32.partialorder %v160, 0.0
  %v182 = vand.u32 %v160, 2147483648
  %v183 = vsel %vm181, %v182, %v180
  %v184 = vrsqrt.pop %v161
  %v185 = vmul.f32 %v161, %v184
  %vm186 = vcmp.eq.f32.partialorder %v161, inf
  %v187 = vsel %vm186, %v161, %v185
  %vm188 = vcmp.eq.f32.partialorder %v161, 0.0
  %v189 = vand.u32 %v161, 2147483648
  %v190 = vsel %vm188, %v189, %v187
  %v191 = vrsqrt.pop %v162
  %v192 = vmul.f32 %v162, %v191
  %vm193 = vcmp.eq.f32.partialorder %v162, inf
  %v194 = vsel %vm193, %v162, %v192
  %vm195 = vcmp.eq.f32.partialorder %v162, 0.0
  %v196 = vand.u32 %v162, 2147483648
  %v197 = vsel %vm195, %v196, %v194
  %198 = vst [vmem:[%s2] sm:$0xff] %v169
  %199 = vst [vmem:[%s2 + $0x8] sm:$0xff] %v176
  %200 = vst [vmem:[%s2 + $0x10] sm:$0xff] %v183
  %201 = vst [vmem:[%s2 + $0x18] sm:$0xff] %v190
  %202 = vst [vmem:[%s2 + $0x20] sm:$0xff] %v197
  // Predicated region
  $region10: #{_lambda_.24} parent=0 // pred_check
    _
  $region11: #{_lambda_.24} parent=0 // pred_check_branch
    %204 = sbr.rel (0) target = $region13
  $region12: #{_lambda_.24} parent=0 // pred_region
    _
  $region13: #{_lambda_.24} parent=0 // pred_fallthru
    _
  // Predicated region
  $region14: #{_lambda_.24} parent=0 // pred_check
    _
  $region15: #{_lambda_.24} parent=0 // pred_check_branch
    %206 = sbr.rel (0) target = $region17
  $region16: #{_lambda_.24} parent=0 // pred_region
    _
  $region17: #{_lambda_.24} parent=0 // pred_fallthru
    _

</llo_original>
